<compile_context>
chip_gen: v7x
topology: tpu7x:2x2x1
jax: 0.10.0
libtpu: 0.0.40
codegen_flags: <defaults>
</compile_context>

<pallas_src>
import functools
import numpy as np
import jax
import jax.numpy as jnp
from jax import lax
from jax.experimental import pallas as pl
from jax.experimental.pallas import tpu as pltpu

CFG = dict(
    vocab_size=64,
    hidden_size=32,
    intermediate_size=64,
    num_layers=2,
    num_heads=4,
    head_dim=8,
    group_size=4,        # S^2-Attn group size
    rms_eps=1e-6,
    rope_base=10000.0,
    lora_rank=8,
    lora_alpha=32,
)

VMEM_SPEC = pl.BlockSpec(memory_space=pltpu.MemorySpace.VMEM)


# ------------------------------ Pallas kernel -------------------------------

def _model_kernel(ids_ref, embed_ref, cos_ref, sin_ref, hm_ref, mask_ref,
                  ln1_ref, wbig_ref, lb_ref, wo_ref, ln2_ref, wgu_ref, wd_ref,
                  fln_ref, o_ref, *, num_layers, num_heads, hidden, inter,
                  batch, seq, eps):
    """Whole LongLoRA forward: embedding -> num_layers transformer layers -> final norm."""
    f32, bf16 = jnp.float32, jnp.bfloat16
    H, Hh = hidden, num_heads
    N = batch * seq                                    # flattened (B, S) rows
    vocab = embed_ref.shape[0]

    def mm(a, b):
        return jnp.dot(a, b, preferred_element_type=f32)

    def rms(v, w):                                     # v [N,H] f32, w [1,H] f32
        var = jnp.mean(v * v, axis=-1, keepdims=True)
        return v * lax.rsqrt(var + eps) * w

    # --- embedding lookup as a one-hot matmul (keeps the whole forward in one kernel)
    ids = ids_ref[...]                                                  # [N,1] int32
    onehot = (ids == lax.broadcasted_iota(jnp.int32, (N, vocab), 1)).astype(f32)
    x = mm(onehot, embed_ref[...])                                      # [N,H] f32 residual

    # --- RoPE tables [S,D] broadcast to [N,H]: tile over heads (lanes) and batch (sublanes)
    cos_sd, sin_sd = cos_ref[...], sin_ref[...]
    cos_row = jnp.concatenate([cos_sd] * Hh, axis=1)                    # [S,H]
    sin_row = jnp.concatenate([sin_sd] * Hh, axis=1)
    cosf = jnp.concatenate([cos_row] * batch, axis=0)                   # [N,H]
    sinf = jnp.concatenate([sin_row] * batch, axis=0)

    headmask = hm_ref[...]            # [Hh*N, H]: 1 where column belongs to the row's head
    amask = mask_ref[...]             # [Hh*N, N]: additive group-causal mask (S^2 shift +
                                      #            batch separation already folded in)

    for l in range(num_layers):
        # --- attention block: rmsnorm -> fused {q,v,q_rot,k,k_rot,loraA} matmul -> LoRA-B -> RoPE
        hb = rms(x, ln1_ref[l]).astype(bf16)
        big = mm(hb, wbig_ref[l])                                       # [N, 5H+2r]
        low = big[:, 5 * H:].astype(bf16)                               # [N, 2r] fused LoRA-A
        qvr = big[:, :3 * H] + mm(low, lb_ref[l])                       # q | v | q_rot (+ LoRA)
        q, v, q_rot = qvr[:, :H], qvr[:, H:2 * H], qvr[:, 2 * H:]
        k, k_rot = big[:, 3 * H:4 * H], big[:, 4 * H:5 * H]
        q = q * cosf + q_rot * sinf        # rotate-half folded into the weights -> VPU-only RoPE
        k = k * cosf + k_rot * sinf        # (1/sqrt(D) already folded into the q-path weights)

        # --- all heads batched along sublanes: rows [h*N:(h+1)*N] hold head h
        q_big = jnp.concatenate([q] * Hh, axis=0) * headmask            # [Hh*N, H]
        s = lax.dot_general(q_big.astype(bf16), k.astype(bf16),
                            (((1,), (1,)), ((), ())),
                            preferred_element_type=f32)                 # [Hh*N, N]
        s = s + amask
        s = s - jnp.max(s, axis=-1, keepdims=True)
        p = jnp.exp(s)
        p = p / jnp.sum(p, axis=-1, keepdims=True)                      # exact softmax (f32)
        o_all = mm(p.astype(bf16), v.astype(bf16)) * headmask           # [Hh*N, H]
        att = o_all[0:N]
        for h in range(1, Hh):                                          # fold heads back to [N,H]
            att = att + o_all[h * N:(h + 1) * N]
        x = x + mm(att.astype(bf16), wo_ref[l])                         # o_proj + residual

        # --- MLP block: rmsnorm -> fused gate|up -> SwiGLU -> down + residual
        h2 = rms(x, ln2_ref[l]).astype(bf16)
        gu = mm(h2, wgu_ref[l])                                         # [N, 2I]
        g, u = gu[:, :inter], gu[:, inter:]
        act = (g * (1.0 / (1.0 + jnp.exp(-g)))) * u                     # exact SiLU (f32)
        x = x + mm(act.astype(bf16), wd_ref[l])

    o_ref[...] = rms(x, fln_ref[...])                                   # final RMSNorm, [N,H]


# --------------------------- constants & params -----------------------------

def build_rope(seq_len, cfg):
    """cos/sin tables stored per-head only: [S, D]."""
    D = cfg['head_dim']
    inv_freq = 1.0 / (cfg['rope_base'] ** (np.arange(0, D, 2, dtype=np.float64) / D))
    t = np.arange(seq_len, dtype=np.float64)
    freqs = np.outer(t, inv_freq)                       # [S, D/2]
    emb = np.concatenate([freqs, freqs], axis=-1)       # [S, D]
    return np.cos(emb).astype(np.float32), np.sin(emb).astype(np.float32)


def build_masks(batch, seq, cfg):
    """Head-column mask and the combined S^2-Attn group-causal additive mask.

    roll(-G/2) -> group causal attention -> roll(+G/2) is exactly plain attention with the
    group-causal mask evaluated at positions shifted by -G/2 (including the wrap-around
    group mixing sequence start/end, matching torch.roll semantics of the reference).
    """
    Hh, D, G = cfg['num_heads'], cfg['head_dim'], cfg['group_size']
    N = batch * seq
    rows = np.arange(Hh * N)
    head = rows // N
    qi = rows % N
    kj = np.arange(N)

    col = np.arange(Hh * D)
    headmask = (col[None, :] // D == head[:, None]).astype(np.float32)          # [Hh*N, H]

    shift = np.where(head >= Hh // 2, G // 2, 0)                                 # per-head shift
    pq = (qi % seq + seq - shift) % seq                                          # effective q pos
    pk = (kj[None, :] % seq + seq - shift[:, None]) % seq                        # effective k pos
    same_batch = (qi[:, None] // seq) == (kj[None, :] // seq)
    same_group = (pq[:, None] // G) == (pk // G)
    causal = pq[:, None] >= pk
    amask = np.where(same_batch & same_group & causal, 0.0, -1e30).astype(np.float32)
    return headmask, amask


def prepare_params(params, cfg):
    """Fuse/reorder weights, fold RoPE rotate-half + scales in, cast matmul weights to bf16."""
    bf16 = jnp.bfloat16
    H, Hh, D = cfg['hidden_size'], cfg['num_heads'], cfg['head_dim']
    rank = cfg['lora_rank']
    lora_scale = cfg['lora_alpha'] / cfg['lora_rank']
    att_scale = 1.0 / (D ** 0.5)

    # rotate_half as a column operator: rotate_half(x) == x @ rot (block-diagonal over heads).
    half = D // 2
    idx = np.arange(half)
    r_d = np.zeros((D, D), np.float32)
    r_d[idx + half, idx] = -1.0
    r_d[idx, idx + half] = 1.0
    rot = jnp.asarray(np.kron(np.eye(Hh, dtype=np.float32), r_d))                # [H, H]

    ln1, ln2, wbig, lb, wo, wgu, wd = [], [], [], [], [], [], []
    for lyr in params['layers']:
        wq = lyr['q_w'] * att_scale                       # fold 1/sqrt(D) into the q path
        bq = lyr['q_lora_b'] * (lora_scale * att_scale)   # fold LoRA + attention scales
        bv = lyr['v_lora_b'] * lora_scale
        # fused base weight: [ q | v | q@R | k | k@R | A_q | A_v ]  -> [H, 5H+2r]
        wbig.append(jnp.concatenate(
            [wq, lyr['v_w'], wq @ rot, lyr['k_w'], lyr['k_w'] @ rot,
             lyr['q_lora_a'], lyr['v_lora_a']], axis=1).astype(bf16))
        # block-diagonal fused LoRA-B producing [dq | dv | dq@R] in one matmul
        lb_l = jnp.zeros((2 * rank, 3 * H), jnp.float32)
        lb_l = lb_l.at[:rank, :H].set(bq)
        lb_l = lb_l.at[rank:, H:2 * H].set(bv)
        lb_l = lb_l.at[:rank, 2 * H:].set(bq @ rot)
        lb.append(lb_l.astype(bf16))
        ln1.append(lyr['input_ln'])
        ln2.append(lyr['post_ln'])
        wo.append(lyr['o_w'].astype(bf16))
        wgu.append(jnp.concatenate([lyr['gate_w'], lyr['up_w']], axis=1).astype(bf16))
        wd.append(lyr['down_w'].astype(bf16))

    return dict(
        embed=params['embed'], final_ln=params['final_ln'],
        ln1=jnp.stack(ln1), ln2=jnp.stack(ln2),
        wbig=jnp.stack(wbig), lb=jnp.stack(lb), wo=jnp.stack(wo),
        wgu=jnp.stack(wgu), wd=jnp.stack(wd))


# ------------------------------ model forward -------------------------------

@jax.jit
def longlora_forward(prepared, input_ids, attention_mask=None):
    # TODO(synk): padding attention_mask is not applied; S^2-Attn here assumes full sequences.
    # TODO(synk): lora_dropout(0.05) omitted - eval-mode forward (dropout off).
    cfg = CFG
    B, S = input_ids.shape
    H = cfg['hidden_size']

    cos, sin = build_rope(S, cfg)                      # numpy constants, folded by jit
    headmask, amask = build_masks(B, S, cfg)
    ids = input_ids.reshape(B * S, 1).astype(jnp.int32)

    kernel = functools.partial(
        _model_kernel,
        num_layers=cfg['num_layers'], num_heads=cfg['num_heads'],
        hidden=H, inter=cfg['intermediate_size'],
        batch=B, seq=S, eps=float(cfg['rms_eps']))

    out = pl.pallas_call(
        kernel,
        out_shape=jax.ShapeDtypeStruct((B * S, H), jnp.float32),
        in_specs=[VMEM_SPEC] * 14,
        out_specs=VMEM_SPEC,
    )(ids, prepared['embed'], cos, sin, headmask, amask,
      prepared['ln1'], prepared['wbig'], prepared['lb'], prepared['wo'],
      prepared['ln2'], prepared['wgu'], prepared['wd'], prepared['final_ln'])

    return out.reshape(B, S, H)      # == LlamaModel(...).last_hidden_state


# --------------------------- deterministic init -----------------------------

def init_params(key, cfg):
    H, I, r = cfg['hidden_size'], cfg['intermediate_size'], cfg['lora_rank']
    keys = iter(jax.random.split(key, 64))

    def w(shape, s=0.02):
        return jax.random.normal(next(keys), shape, jnp.float32) * s

    params = dict(
        embed=w((cfg['vocab_size'], H)),
        final_ln=jnp.ones((1, H), jnp.float32),
        layers=[],
    )
    for _ in range(cfg['num_layers']):
        params['layers'].append(dict(
            input_ln=jnp.ones((1, H), jnp.float32),
            post_ln=jnp.ones((1, H), jnp.float32),
            q_w=w((H, H)), k_w=w((H, H)), v_w=w((H, H)), o_w=w((H, H)),
            # NOTE: canonical LoRA inits B=0; nonzero here so the LoRA path is exercised.
            q_lora_a=w((H, r)), q_lora_b=w((r, H)),
            v_lora_a=w((H, r)), v_lora_b=w((r, H)),
            gate_w=w((H, I)), up_w=w((H, I)), down_w=w((I, H)),
        ))
    return params


if __name__ == "__main__":
    key = jax.random.PRNGKey(0)
    pkey, dkey = jax.random.split(key)
    params = prepare_params(init_params(pkey, CFG), CFG)

    B, S = 2, 8
    input_ids = jax.random.randint(dkey, (B, S), 0, CFG['vocab_size'], dtype=jnp.int32)

    out = longlora_forward(params, input_ids)
    jax.block_until_ready(out)
    assert out.shape == (B, S, CFG['hidden_size'])
    assert bool(jnp.all(jnp.isfinite(out)))
    print("KERNEL_OK")
</pallas_src>

<mosaic_0001>
module attributes {stable_mosaic.version = 11 : i64} {
  func.func @_model_kernel(%arg0: memref<16x1xi32, #tpu.memory_space<vmem>>, %arg1: memref<64x32xf32, #tpu.memory_space<vmem>>, %arg2: memref<8x8xf32, #tpu.memory_space<vmem>>, %arg3: memref<8x8xf32, #tpu.memory_space<vmem>>, %arg4: memref<64x32xf32, #tpu.memory_space<vmem>>, %arg5: memref<64x16xf32, #tpu.memory_space<vmem>>, %arg6: memref<2x1x32xf32, #tpu.memory_space<vmem>>, %arg7: memref<2x32x176xbf16, #tpu.memory_space<vmem>>, %arg8: memref<2x16x96xbf16, #tpu.memory_space<vmem>>, %arg9: memref<2x32x32xbf16, #tpu.memory_space<vmem>>, %arg10: memref<2x1x32xf32, #tpu.memory_space<vmem>>, %arg11: memref<2x32x128xbf16, #tpu.memory_space<vmem>>, %arg12: memref<2x64x32xbf16, #tpu.memory_space<vmem>>, %arg13: memref<1x32xf32, #tpu.memory_space<vmem>>, %arg14: memref<16x32xf32, #tpu.memory_space<vmem>>) attributes {dimension_semantics = [], scalar_prefetch = 0 : i64, scratch_operands = 0 : i64, tpu.core_type = #tpu.core_type<tc>} {
    %c0 = arith.constant 0 : index
    %c0_0 = arith.constant 0 : index
    %0 = vector.load %arg0[%c0, %c0_0] : memref<16x1xi32, #tpu.memory_space<vmem>>, vector<16x1xi32>
    %1 = tpu.iota {dimensions = array<i32: 1>} : vector<16x64xi32>
    %2 = vector.broadcast %0 : vector<16x1xi32> to vector<16x64xi32>
    %3 = arith.cmpi eq, %2, %1 : vector<16x64xi32>
    %4 = arith.extui %3 : vector<16x64xi1> to vector<16x64xi32>
    %5 = arith.sitofp %4 : vector<16x64xi32> to vector<16x64xf32>
    %c0_1 = arith.constant 0 : index
    %c0_2 = arith.constant 0 : index
    %6 = vector.load %arg1[%c0_1, %c0_2] : memref<64x32xf32, #tpu.memory_space<vmem>>, vector<64x32xf32>
    %cst = arith.constant dense<0.000000e+00> : vector<16x32xf32>
    %7 = tpu.matmul %5, %6, %cst {dimension_numbers = #tpu.dot_dimension_numbers<[1], [0], [0], [1], [0, 0, 1, 1], [], []>} : vector<16x64xf32>, vector<64x32xf32>, vector<16x32xf32> -> vector<16x32xf32>
    %c0_3 = arith.constant 0 : index
    %c0_4 = arith.constant 0 : index
    %8 = vector.load %arg2[%c0_3, %c0_4] : memref<8x8xf32, #tpu.memory_space<vmem>>, vector<8x8xf32>
    %c0_5 = arith.constant 0 : index
    %c0_6 = arith.constant 0 : index
    %9 = vector.load %arg3[%c0_5, %c0_6] : memref<8x8xf32, #tpu.memory_space<vmem>>, vector<8x8xf32>
    %10 = tpu.concatenate %8, %8, %8, %8 in 1 : vector<8x8xf32>, vector<8x8xf32>, vector<8x8xf32>, vector<8x8xf32> -> vector<8x32xf32>
    %11 = tpu.concatenate %9, %9, %9, %9 in 1 : vector<8x8xf32>, vector<8x8xf32>, vector<8x8xf32>, vector<8x8xf32> -> vector<8x32xf32>
    %12 = tpu.concatenate %10, %10 in 0 : vector<8x32xf32>, vector<8x32xf32> -> vector<16x32xf32>
    %13 = tpu.concatenate %11, %11 in 0 : vector<8x32xf32>, vector<8x32xf32> -> vector<16x32xf32>
    %c0_7 = arith.constant 0 : index
    %c0_8 = arith.constant 0 : index
    %14 = vector.load %arg4[%c0_7, %c0_8] : memref<64x32xf32, #tpu.memory_space<vmem>>, vector<64x32xf32>
    %c0_9 = arith.constant 0 : index
    %c0_10 = arith.constant 0 : index
    %15 = vector.load %arg5[%c0_9, %c0_10] : memref<64x16xf32, #tpu.memory_space<vmem>>, vector<64x16xf32>
    %c0_11 = arith.constant 0 : index
    %c0_12 = arith.constant 0 : index
    %c0_13 = arith.constant 0 : index
    %16 = vector.load %arg6[%c0_11, %c0_12, %c0_13] : memref<2x1x32xf32, #tpu.memory_space<vmem>>, vector<1x1x32xf32>
    %17 = vector.shape_cast %16 : vector<1x1x32xf32> to vector<1x32xf32>
    %18 = arith.mulf %7, %7 : vector<16x32xf32>
    %cst_14 = arith.constant dense<0.000000e+00> : vector<16xf32>
    %19 = vector.multi_reduction <add>, %18, %cst_14 [1] : vector<16x32xf32> to vector<16xf32>
    %20 = vector.shape_cast %19 : vector<16xf32> to vector<16x1xf32>
    %cst_15 = arith.constant 3.200000e+01 : f32
    %21 = vector.broadcast %cst_15 : f32 to vector<16x1xf32>
    %22 = arith.divf %20, %21 : vector<16x1xf32>
    %cst_16 = arith.constant 9.99999997E-7 : f32
    %23 = vector.broadcast %cst_16 : f32 to vector<16x1xf32>
    %24 = arith.addf %22, %23 : vector<16x1xf32>
    %25 = math.rsqrt %24 : vector<16x1xf32>
    %26 = vector.broadcast %25 : vector<16x1xf32> to vector<16x32xf32>
    %27 = arith.mulf %7, %26 : vector<16x32xf32>
    %28 = vector.broadcast %17 : vector<1x32xf32> to vector<16x32xf32>
    %29 = arith.mulf %27, %28 : vector<16x32xf32>
    %30 = arith.truncf %29 : vector<16x32xf32> to vector<16x32xbf16>
    %c0_17 = arith.constant 0 : index
    %c0_18 = arith.constant 0 : index
    %c0_19 = arith.constant 0 : index
    %31 = vector.load %arg7[%c0_17, %c0_18, %c0_19] : memref<2x32x176xbf16, #tpu.memory_space<vmem>>, vector<1x32x176xbf16>
    %32 = vector.shape_cast %31 : vector<1x32x176xbf16> to vector<32x176xbf16>
    %cst_20 = arith.constant dense<0.000000e+00> : vector<16x176xf32>
    %33 = tpu.matmul %30, %32, %cst_20 {dimension_numbers = #tpu.dot_dimension_numbers<[1], [0], [0], [1], [0, 0, 1, 1], [], []>} : vector<16x32xbf16>, vector<32x176xbf16>, vector<16x176xf32> -> vector<16x176xf32>
    %34 = vector.extract_strided_slice %33 {offsets = [0, 160], sizes = [16, 16], strides = [1, 1]} : vector<16x176xf32> to vector<16x16xf32>
    %35 = arith.truncf %34 : vector<16x16xf32> to vector<16x16xbf16>
    %36 = vector.extract_strided_slice %33 {offsets = [0, 0], sizes = [16, 96], strides = [1, 1]} : vector<16x176xf32> to vector<16x96xf32>
    %c0_21 = arith.constant 0 : index
    %c0_22 = arith.constant 0 : index
    %c0_23 = arith.constant 0 : index
    %37 = vector.load %arg8[%c0_21, %c0_22, %c0_23] : memref<2x16x96xbf16, #tpu.memory_space<vmem>>, vector<1x16x96xbf16>
    %38 = vector.shape_cast %37 : vector<1x16x96xbf16> to vector<16x96xbf16>
    %cst_24 = arith.constant dense<0.000000e+00> : vector<16x96xf32>
    %39 = tpu.matmul %35, %38, %cst_24 {dimension_numbers = #tpu.dot_dimension_numbers<[1], [0], [0], [1], [0, 0, 1, 1], [], []>} : vector<16x16xbf16>, vector<16x96xbf16>, vector<16x96xf32> -> vector<16x96xf32>
    %40 = arith.addf %36, %39 : vector<16x96xf32>
    %41 = vector.extract_strided_slice %40 {offsets = [0, 0], sizes = [16, 32], strides = [1, 1]} : vector<16x96xf32> to vector<16x32xf32>
    %42 = vector.extract_strided_slice %40 {offsets = [0, 32], sizes = [16, 32], strides = [1, 1]} : vector<16x96xf32> to vector<16x32xf32>
    %43 = vector.extract_strided_slice %40 {offsets = [0, 64], sizes = [16, 32], strides = [1, 1]} : vector<16x96xf32> to vector<16x32xf32>
    %44 = vector.extract_strided_slice %33 {offsets = [0, 96], sizes = [16, 32], strides = [1, 1]} : vector<16x176xf32> to vector<16x32xf32>
    %45 = vector.extract_strided_slice %33 {offsets = [0, 128], sizes = [16, 32], strides = [1, 1]} : vector<16x176xf32> to vector<16x32xf32>
    %46 = arith.mulf %41, %12 : vector<16x32xf32>
    %47 = arith.mulf %43, %13 : vector<16x32xf32>
    %48 = arith.addf %46, %47 : vector<16x32xf32>
    %49 = arith.mulf %44, %12 : vector<16x32xf32>
    %50 = arith.mulf %45, %13 : vector<16x32xf32>
    %51 = arith.addf %49, %50 : vector<16x32xf32>
    %52 = tpu.concatenate %48, %48, %48, %48 in 0 : vector<16x32xf32>, vector<16x32xf32>, vector<16x32xf32>, vector<16x32xf32> -> vector<64x32xf32>
    %53 = arith.mulf %52, %14 : vector<64x32xf32>
    %54 = arith.truncf %53 : vector<64x32xf32> to vector<64x32xbf16>
    %55 = arith.truncf %51 : vector<16x32xf32> to vector<16x32xbf16>
    %cst_25 = arith.constant dense<0.000000e+00> : vector<64x16xf32>
    %56 = tpu.matmul %54, %55, %cst_25 {dimension_numbers = #tpu.dot_dimension_numbers<[1], [1], [0], [0], [0, 0, 1, 0], [], []>} : vector<64x32xbf16>, vector<16x32xbf16>, vector<64x16xf32> -> vector<64x16xf32>
    %57 = arith.addf %56, %15 : vector<64x16xf32>
    %cst_26 = arith.constant dense<0xFF800000> : vector<64xf32>
    %58 = vector.multi_reduction <maximumf>, %57, %cst_26 [1] : vector<64x16xf32> to vector<64xf32>
    %59 = vector.shape_cast %58 : vector<64xf32> to vector<64x1xf32>
    %60 = vector.broadcast %59 : vector<64x1xf32> to vector<64x16xf32>
    %61 = arith.subf %57, %60 : vector<64x16xf32>
    %62 = math.exp %61 : vector<64x16xf32>
    %cst_27 = arith.constant dense<0.000000e+00> : vector<64xf32>
    %63 = vector.multi_reduction <add>, %62, %cst_27 [1] : vector<64x16xf32> to vector<64xf32>
    %64 = vector.shape_cast %63 : vector<64xf32> to vector<64x1xf32>
    %65 = vector.broadcast %64 : vector<64x1xf32> to vector<64x16xf32>
    %66 = arith.divf %62, %65 : vector<64x16xf32>
    %67 = arith.truncf %66 : vector<64x16xf32> to vector<64x16xbf16>
    %68 = arith.truncf %42 : vector<16x32xf32> to vector<16x32xbf16>
    %cst_28 = arith.constant dense<0.000000e+00> : vector<64x32xf32>
    %69 = tpu.matmul %67, %68, %cst_28 {dimension_numbers = #tpu.dot_dimension_numbers<[1], [0], [0], [1], [0, 0, 1, 1], [], []>} : vector<64x16xbf16>, vector<16x32xbf16>, vector<64x32xf32> -> vector<64x32xf32>
    %70 = arith.mulf %69, %14 : vector<64x32xf32>
    %71 = vector.extract_strided_slice %70 {offsets = [0, 0], sizes = [16, 32], strides = [1, 1]} : vector<64x32xf32> to vector<16x32xf32>
    %72 = vector.extract_strided_slice %70 {offsets = [16, 0], sizes = [16, 32], strides = [1, 1]} : vector<64x32xf32> to vector<16x32xf32>
    %73 = arith.addf %71, %72 : vector<16x32xf32>
    %74 = vector.extract_strided_slice %70 {offsets = [32, 0], sizes = [16, 32], strides = [1, 1]} : vector<64x32xf32> to vector<16x32xf32>
    %75 = arith.addf %73, %74 : vector<16x32xf32>
    %76 = vector.extract_strided_slice %70 {offsets = [48, 0], sizes = [16, 32], strides = [1, 1]} : vector<64x32xf32> to vector<16x32xf32>
    %77 = arith.addf %75, %76 : vector<16x32xf32>
    %78 = arith.truncf %77 : vector<16x32xf32> to vector<16x32xbf16>
    %c0_29 = arith.constant 0 : index
    %c0_30 = arith.constant 0 : index
    %c0_31 = arith.constant 0 : index
    %79 = vector.load %arg9[%c0_29, %c0_30, %c0_31] : memref<2x32x32xbf16, #tpu.memory_space<vmem>>, vector<1x32x32xbf16>
    %80 = vector.shape_cast %79 : vector<1x32x32xbf16> to vector<32x32xbf16>
    %cst_32 = arith.constant dense<0.000000e+00> : vector<16x32xf32>
    %81 = tpu.matmul %78, %80, %cst_32 {dimension_numbers = #tpu.dot_dimension_numbers<[1], [0], [0], [1], [0, 0, 1, 1], [], []>} : vector<16x32xbf16>, vector<32x32xbf16>, vector<16x32xf32> -> vector<16x32xf32>
    %82 = arith.addf %7, %81 : vector<16x32xf32>
    %c0_33 = arith.constant 0 : index
    %c0_34 = arith.constant 0 : index
    %c0_35 = arith.constant 0 : index
    %83 = vector.load %arg10[%c0_33, %c0_34, %c0_35] : memref<2x1x32xf32, #tpu.memory_space<vmem>>, vector<1x1x32xf32>
    %84 = vector.shape_cast %83 : vector<1x1x32xf32> to vector<1x32xf32>
    %85 = arith.mulf %82, %82 : vector<16x32xf32>
    %cst_36 = arith.constant dense<0.000000e+00> : vector<16xf32>
    %86 = vector.multi_reduction <add>, %85, %cst_36 [1] : vector<16x32xf32> to vector<16xf32>
    %87 = vector.shape_cast %86 : vector<16xf32> to vector<16x1xf32>
    %cst_37 = arith.constant 3.200000e+01 : f32
    %88 = vector.broadcast %cst_37 : f32 to vector<16x1xf32>
    %89 = arith.divf %87, %88 : vector<16x1xf32>
    %cst_38 = arith.constant 9.99999997E-7 : f32
    %90 = vector.broadcast %cst_38 : f32 to vector<16x1xf32>
    %91 = arith.addf %89, %90 : vector<16x1xf32>
    %92 = math.rsqrt %91 : vector<16x1xf32>
    %93 = vector.broadcast %92 : vector<16x1xf32> to vector<16x32xf32>
    %94 = arith.mulf %82, %93 : vector<16x32xf32>
    %95 = vector.broadcast %84 : vector<1x32xf32> to vector<16x32xf32>
    %96 = arith.mulf %94, %95 : vector<16x32xf32>
    %97 = arith.truncf %96 : vector<16x32xf32> to vector<16x32xbf16>
    %c0_39 = arith.constant 0 : index
    %c0_40 = arith.constant 0 : index
    %c0_41 = arith.constant 0 : index
    %98 = vector.load %arg11[%c0_39, %c0_40, %c0_41] : memref<2x32x128xbf16, #tpu.memory_space<vmem>>, vector<1x32x128xbf16>
    %99 = vector.shape_cast %98 : vector<1x32x128xbf16> to vector<32x128xbf16>
    %cst_42 = arith.constant dense<0.000000e+00> : vector<16x128xf32>
    %100 = tpu.matmul %97, %99, %cst_42 {dimension_numbers = #tpu.dot_dimension_numbers<[1], [0], [0], [1], [0, 0, 1, 1], [], []>} : vector<16x32xbf16>, vector<32x128xbf16>, vector<16x128xf32> -> vector<16x128xf32>
    %101 = vector.extract_strided_slice %100 {offsets = [0, 0], sizes = [16, 64], strides = [1, 1]} : vector<16x128xf32> to vector<16x64xf32>
    %102 = vector.extract_strided_slice %100 {offsets = [0, 64], sizes = [16, 64], strides = [1, 1]} : vector<16x128xf32> to vector<16x64xf32>
    %cst_43 = arith.constant 0.000000e+00 : f32
    %103 = vector.broadcast %cst_43 : f32 to vector<16x64xf32>
    %104 = arith.subf %103, %101 : vector<16x64xf32>
    %105 = math.exp %104 : vector<16x64xf32>
    %cst_44 = arith.constant 1.000000e+00 : f32
    %106 = vector.broadcast %cst_44 : f32 to vector<16x64xf32>
    %107 = arith.addf %106, %105 : vector<16x64xf32>
    %cst_45 = arith.constant 1.000000e+00 : f32
    %108 = vector.broadcast %cst_45 : f32 to vector<16x64xf32>
    %109 = arith.divf %108, %107 : vector<16x64xf32>
    %110 = arith.mulf %101, %109 : vector<16x64xf32>
    %111 = arith.mulf %110, %102 : vector<16x64xf32>
    %112 = arith.truncf %111 : vector<16x64xf32> to vector<16x64xbf16>
    %c0_46 = arith.constant 0 : index
    %c0_47 = arith.constant 0 : index
    %c0_48 = arith.constant 0 : index
    %113 = vector.load %arg12[%c0_46, %c0_47, %c0_48] : memref<2x64x32xbf16, #tpu.memory_space<vmem>>, vector<1x64x32xbf16>
    %114 = vector.shape_cast %113 : vector<1x64x32xbf16> to vector<64x32xbf16>
    %cst_49 = arith.constant dense<0.000000e+00> : vector<16x32xf32>
    %115 = tpu.matmul %112, %114, %cst_49 {dimension_numbers = #tpu.dot_dimension_numbers<[1], [0], [0], [1], [0, 0, 1, 1], [], []>} : vector<16x64xbf16>, vector<64x32xbf16>, vector<16x32xf32> -> vector<16x32xf32>
    %116 = arith.addf %82, %115 : vector<16x32xf32>
    %c1 = arith.constant 1 : index
    %c0_50 = arith.constant 0 : index
    %c0_51 = arith.constant 0 : index
    %117 = vector.load %arg6[%c1, %c0_50, %c0_51] : memref<2x1x32xf32, #tpu.memory_space<vmem>>, vector<1x1x32xf32>
    %118 = vector.shape_cast %117 : vector<1x1x32xf32> to vector<1x32xf32>
    %119 = arith.mulf %116, %116 : vector<16x32xf32>
    %cst_52 = arith.constant dense<0.000000e+00> : vector<16xf32>
    %120 = vector.multi_reduction <add>, %119, %cst_52 [1] : vector<16x32xf32> to vector<16xf32>
    %121 = vector.shape_cast %120 : vector<16xf32> to vector<16x1xf32>
    %cst_53 = arith.constant 3.200000e+01 : f32
    %122 = vector.broadcast %cst_53 : f32 to vector<16x1xf32>
    %123 = arith.divf %121, %122 : vector<16x1xf32>
    %cst_54 = arith.constant 9.99999997E-7 : f32
    %124 = vector.broadcast %cst_54 : f32 to vector<16x1xf32>
    %125 = arith.addf %123, %124 : vector<16x1xf32>
    %126 = math.rsqrt %125 : vector<16x1xf32>
    %127 = vector.broadcast %126 : vector<16x1xf32> to vector<16x32xf32>
    %128 = arith.mulf %116, %127 : vector<16x32xf32>
    %129 = vector.broadcast %118 : vector<1x32xf32> to vector<16x32xf32>
    %130 = arith.mulf %128, %129 : vector<16x32xf32>
    %131 = arith.truncf %130 : vector<16x32xf32> to vector<16x32xbf16>
    %c1_55 = arith.constant 1 : index
    %c0_56 = arith.constant 0 : index
    %c0_57 = arith.constant 0 : index
    %132 = vector.load %arg7[%c1_55, %c0_56, %c0_57] : memref<2x32x176xbf16, #tpu.memory_space<vmem>>, vector<1x32x176xbf16>
    %133 = vector.shape_cast %132 : vector<1x32x176xbf16> to vector<32x176xbf16>
    %cst_58 = arith.constant dense<0.000000e+00> : vector<16x176xf32>
    %134 = tpu.matmul %131, %133, %cst_58 {dimension_numbers = #tpu.dot_dimension_numbers<[1], [0], [0], [1], [0, 0, 1, 1], [], []>} : vector<16x32xbf16>, vector<32x176xbf16>, vector<16x176xf32> -> vector<16x176xf32>
    %135 = vector.extract_strided_slice %134 {offsets = [0, 160], sizes = [16, 16], strides = [1, 1]} : vector<16x176xf32> to vector<16x16xf32>
    %136 = arith.truncf %135 : vector<16x16xf32> to vector<16x16xbf16>
    %137 = vector.extract_strided_slice %134 {offsets = [0, 0], sizes = [16, 96], strides = [1, 1]} : vector<16x176xf32> to vector<16x96xf32>
    %c1_59 = arith.constant 1 : index
    %c0_60 = arith.constant 0 : index
    %c0_61 = arith.constant 0 : index
    %138 = vector.load %arg8[%c1_59, %c0_60, %c0_61] : memref<2x16x96xbf16, #tpu.memory_space<vmem>>, vector<1x16x96xbf16>
    %139 = vector.shape_cast %138 : vector<1x16x96xbf16> to vector<16x96xbf16>
    %cst_62 = arith.constant dense<0.000000e+00> : vector<16x96xf32>
    %140 = tpu.matmul %136, %139, %cst_62 {dimension_numbers = #tpu.dot_dimension_numbers<[1], [0], [0], [1], [0, 0, 1, 1], [], []>} : vector<16x16xbf16>, vector<16x96xbf16>, vector<16x96xf32> -> vector<16x96xf32>
    %141 = arith.addf %137, %140 : vector<16x96xf32>
    %142 = vector.extract_strided_slice %141 {offsets = [0, 0], sizes = [16, 32], strides = [1, 1]} : vector<16x96xf32> to vector<16x32xf32>
    %143 = vector.extract_strided_slice %141 {offsets = [0, 32], sizes = [16, 32], strides = [1, 1]} : vector<16x96xf32> to vector<16x32xf32>
    %144 = vector.extract_strided_slice %141 {offsets = [0, 64], sizes = [16, 32], strides = [1, 1]} : vector<16x96xf32> to vector<16x32xf32>
    %145 = vector.extract_strided_slice %134 {offsets = [0, 96], sizes = [16, 32], strides = [1, 1]} : vector<16x176xf32> to vector<16x32xf32>
    %146 = vector.extract_strided_slice %134 {offsets = [0, 128], sizes = [16, 32], strides = [1, 1]} : vector<16x176xf32> to vector<16x32xf32>
    %147 = arith.mulf %142, %12 : vector<16x32xf32>
    %148 = arith.mulf %144, %13 : vector<16x32xf32>
    %149 = arith.addf %147, %148 : vector<16x32xf32>
    %150 = arith.mulf %145, %12 : vector<16x32xf32>
    %151 = arith.mulf %146, %13 : vector<16x32xf32>
    %152 = arith.addf %150, %151 : vector<16x32xf32>
    %153 = tpu.concatenate %149, %149, %149, %149 in 0 : vector<16x32xf32>, vector<16x32xf32>, vector<16x32xf32>, vector<16x32xf32> -> vector<64x32xf32>
    %154 = arith.mulf %153, %14 : vector<64x32xf32>
    %155 = arith.truncf %154 : vector<64x32xf32> to vector<64x32xbf16>
    %156 = arith.truncf %152 : vector<16x32xf32> to vector<16x32xbf16>
    %cst_63 = arith.constant dense<0.000000e+00> : vector<64x16xf32>
    %157 = tpu.matmul %155, %156, %cst_63 {dimension_numbers = #tpu.dot_dimension_numbers<[1], [1], [0], [0], [0, 0, 1, 0], [], []>} : vector<64x32xbf16>, vector<16x32xbf16>, vector<64x16xf32> -> vector<64x16xf32>
    %158 = arith.addf %157, %15 : vector<64x16xf32>
    %cst_64 = arith.constant dense<0xFF800000> : vector<64xf32>
    %159 = vector.multi_reduction <maximumf>, %158, %cst_64 [1] : vector<64x16xf32> to vector<64xf32>
    %160 = vector.shape_cast %159 : vector<64xf32> to vector<64x1xf32>
    %161 = vector.broadcast %160 : vector<64x1xf32> to vector<64x16xf32>
    %162 = arith.subf %158, %161 : vector<64x16xf32>
    %163 = math.exp %162 : vector<64x16xf32>
    %cst_65 = arith.constant dense<0.000000e+00> : vector<64xf32>
    %164 = vector.multi_reduction <add>, %163, %cst_65 [1] : vector<64x16xf32> to vector<64xf32>
    %165 = vector.shape_cast %164 : vector<64xf32> to vector<64x1xf32>
    %166 = vector.broadcast %165 : vector<64x1xf32> to vector<64x16xf32>
    %167 = arith.divf %163, %166 : vector<64x16xf32>
    %168 = arith.truncf %167 : vector<64x16xf32> to vector<64x16xbf16>
    %169 = arith.truncf %143 : vector<16x32xf32> to vector<16x32xbf16>
    %cst_66 = arith.constant dense<0.000000e+00> : vector<64x32xf32>
    %170 = tpu.matmul %168, %169, %cst_66 {dimension_numbers = #tpu.dot_dimension_numbers<[1], [0], [0], [1], [0, 0, 1, 1], [], []>} : vector<64x16xbf16>, vector<16x32xbf16>, vector<64x32xf32> -> vector<64x32xf32>
    %171 = arith.mulf %170, %14 : vector<64x32xf32>
    %172 = vector.extract_strided_slice %171 {offsets = [0, 0], sizes = [16, 32], strides = [1, 1]} : vector<64x32xf32> to vector<16x32xf32>
    %173 = vector.extract_strided_slice %171 {offsets = [16, 0], sizes = [16, 32], strides = [1, 1]} : vector<64x32xf32> to vector<16x32xf32>
    %174 = arith.addf %172, %173 : vector<16x32xf32>
    %175 = vector.extract_strided_slice %171 {offsets = [32, 0], sizes = [16, 32], strides = [1, 1]} : vector<64x32xf32> to vector<16x32xf32>
    %176 = arith.addf %174, %175 : vector<16x32xf32>
    %177 = vector.extract_strided_slice %171 {offsets = [48, 0], sizes = [16, 32], strides = [1, 1]} : vector<64x32xf32> to vector<16x32xf32>
    %178 = arith.addf %176, %177 : vector<16x32xf32>
    %179 = arith.truncf %178 : vector<16x32xf32> to vector<16x32xbf16>
    %c1_67 = arith.constant 1 : index
    %c0_68 = arith.constant 0 : index
    %c0_69 = arith.constant 0 : index
    %180 = vector.load %arg9[%c1_67, %c0_68, %c0_69] : memref<2x32x32xbf16, #tpu.memory_space<vmem>>, vector<1x32x32xbf16>
    %181 = vector.shape_cast %180 : vector<1x32x32xbf16> to vector<32x32xbf16>
    %cst_70 = arith.constant dense<0.000000e+00> : vector<16x32xf32>
    %182 = tpu.matmul %179, %181, %cst_70 {dimension_numbers = #tpu.dot_dimension_numbers<[1], [0], [0], [1], [0, 0, 1, 1], [], []>} : vector<16x32xbf16>, vector<32x32xbf16>, vector<16x32xf32> -> vector<16x32xf32>
    %183 = arith.addf %116, %182 : vector<16x32xf32>
    %c1_71 = arith.constant 1 : index
    %c0_72 = arith.constant 0 : index
    %c0_73 = arith.constant 0 : index
    %184 = vector.load %arg10[%c1_71, %c0_72, %c0_73] : memref<2x1x32xf32, #tpu.memory_space<vmem>>, vector<1x1x32xf32>
    %185 = vector.shape_cast %184 : vector<1x1x32xf32> to vector<1x32xf32>
    %186 = arith.mulf %183, %183 : vector<16x32xf32>
    %cst_74 = arith.constant dense<0.000000e+00> : vector<16xf32>
    %187 = vector.multi_reduction <add>, %186, %cst_74 [1] : vector<16x32xf32> to vector<16xf32>
    %188 = vector.shape_cast %187 : vector<16xf32> to vector<16x1xf32>
    %cst_75 = arith.constant 3.200000e+01 : f32
    %189 = vector.broadcast %cst_75 : f32 to vector<16x1xf32>
    %190 = arith.divf %188, %189 : vector<16x1xf32>
    %cst_76 = arith.constant 9.99999997E-7 : f32
    %191 = vector.broadcast %cst_76 : f32 to vector<16x1xf32>
    %192 = arith.addf %190, %191 : vector<16x1xf32>
    %193 = math.rsqrt %192 : vector<16x1xf32>
    %194 = vector.broadcast %193 : vector<16x1xf32> to vector<16x32xf32>
    %195 = arith.mulf %183, %194 : vector<16x32xf32>
    %196 = vector.broadcast %185 : vector<1x32xf32> to vector<16x32xf32>
    %197 = arith.mulf %195, %196 : vector<16x32xf32>
    %198 = arith.truncf %197 : vector<16x32xf32> to vector<16x32xbf16>
    %c1_77 = arith.constant 1 : index
    %c0_78 = arith.constant 0 : index
    %c0_79 = arith.constant 0 : index
    %199 = vector.load %arg11[%c1_77, %c0_78, %c0_79] : memref<2x32x128xbf16, #tpu.memory_space<vmem>>, vector<1x32x128xbf16>
    %200 = vector.shape_cast %199 : vector<1x32x128xbf16> to vector<32x128xbf16>
    %cst_80 = arith.constant dense<0.000000e+00> : vector<16x128xf32>
    %201 = tpu.matmul %198, %200, %cst_80 {dimension_numbers = #tpu.dot_dimension_numbers<[1], [0], [0], [1], [0, 0, 1, 1], [], []>} : vector<16x32xbf16>, vector<32x128xbf16>, vector<16x128xf32> -> vector<16x128xf32>
    %202 = vector.extract_strided_slice %201 {offsets = [0, 0], sizes = [16, 64], strides = [1, 1]} : vector<16x128xf32> to vector<16x64xf32>
    %203 = vector.extract_strided_slice %201 {offsets = [0, 64], sizes = [16, 64], strides = [1, 1]} : vector<16x128xf32> to vector<16x64xf32>
    %cst_81 = arith.constant 0.000000e+00 : f32
    %204 = vector.broadcast %cst_81 : f32 to vector<16x64xf32>
    %205 = arith.subf %204, %202 : vector<16x64xf32>
    %206 = math.exp %205 : vector<16x64xf32>
    %cst_82 = arith.constant 1.000000e+00 : f32
    %207 = vector.broadcast %cst_82 : f32 to vector<16x64xf32>
    %208 = arith.addf %207, %206 : vector<16x64xf32>
    %cst_83 = arith.constant 1.000000e+00 : f32
    %209 = vector.broadcast %cst_83 : f32 to vector<16x64xf32>
    %210 = arith.divf %209, %208 : vector<16x64xf32>
    %211 = arith.mulf %202, %210 : vector<16x64xf32>
    %212 = arith.mulf %211, %203 : vector<16x64xf32>
    %213 = arith.truncf %212 : vector<16x64xf32> to vector<16x64xbf16>
    %c1_84 = arith.constant 1 : index
    %c0_85 = arith.constant 0 : index
    %c0_86 = arith.constant 0 : index
    %214 = vector.load %arg12[%c1_84, %c0_85, %c0_86] : memref<2x64x32xbf16, #tpu.memory_space<vmem>>, vector<1x64x32xbf16>
    %215 = vector.shape_cast %214 : vector<1x64x32xbf16> to vector<64x32xbf16>
    %cst_87 = arith.constant dense<0.000000e+00> : vector<16x32xf32>
    %216 = tpu.matmul %213, %215, %cst_87 {dimension_numbers = #tpu.dot_dimension_numbers<[1], [0], [0], [1], [0, 0, 1, 1], [], []>} : vector<16x64xbf16>, vector<64x32xbf16>, vector<16x32xf32> -> vector<16x32xf32>
    %217 = arith.addf %183, %216 : vector<16x32xf32>
    %c0_88 = arith.constant 0 : index
    %c0_89 = arith.constant 0 : index
    %218 = vector.load %arg13[%c0_88, %c0_89] : memref<1x32xf32, #tpu.memory_space<vmem>>, vector<1x32xf32>
    %219 = arith.mulf %217, %217 : vector<16x32xf32>
    %cst_90 = arith.constant dense<0.000000e+00> : vector<16xf32>
    %220 = vector.multi_reduction <add>, %219, %cst_90 [1] : vector<16x32xf32> to vector<16xf32>
    %221 = vector.shape_cast %220 : vector<16xf32> to vector<16x1xf32>
    %cst_91 = arith.constant 3.200000e+01 : f32
    %222 = vector.broadcast %cst_91 : f32 to vector<16x1xf32>
    %223 = arith.divf %221, %222 : vector<16x1xf32>
    %cst_92 = arith.constant 9.99999997E-7 : f32
    %224 = vector.broadcast %cst_92 : f32 to vector<16x1xf32>
    %225 = arith.addf %223, %224 : vector<16x1xf32>
    %226 = math.rsqrt %225 : vector<16x1xf32>
    %227 = vector.broadcast %226 : vector<16x1xf32> to vector<16x32xf32>
    %228 = arith.mulf %217, %227 : vector<16x32xf32>
    %229 = vector.broadcast %218 : vector<1x32xf32> to vector<16x32xf32>
    %230 = arith.mulf %228, %229 : vector<16x32xf32>
    %c0_93 = arith.constant 0 : index
    %c0_94 = arith.constant 0 : index
    %231 = vector.load %arg14[%c0_93, %c0_94] : memref<16x32xf32, #tpu.memory_space<vmem>>, vector<16x32xf32>
    tpu.vector_store %arg14[%c0_93, %c0_94], %230 {strides = array<i32>} : memref<16x32xf32, #tpu.memory_space<vmem>>, vector<16x32xf32>,
    return
  }
}

</mosaic_0001>

<llo_original>
// kernel: longlora_forward.1
$region0: #{longlora_forward.1}
  #allocation0 [shape = 'u32[]', space=smem, size = 0x4, offset = 0x4, fixed_abs, tag = 'smem constant byte address 0x4 - core index']
  #allocation1 [shape = 'u32[144,128]{1,0:T(1,128)}', space=vmem, size = 0x12000, scoped, tag = 'internal scratch']
  %s0 = inlined_call_operand.vmem [shape: s32[16,1], index: 0, kind: input, shape index: {}]
  %s1 = inlined_call_operand.vmem [shape: f32[64,32], index: 1, kind: input, shape index: {}]
  %s2 = inlined_call_operand.vmem [shape: f32[8,8], index: 2, kind: input, shape index: {}]
  %s3 = inlined_call_operand.vmem [shape: f32[8,8], index: 3, kind: input, shape index: {}]
  %s4 = inlined_call_operand.vmem [shape: f32[64,32], index: 4, kind: input, shape index: {}]
  %s5 = inlined_call_operand.vmem [shape: f32[64,16], index: 5, kind: input, shape index: {}]
  %s6 = inlined_call_operand.hbm [shape: f32[2,1,32], index: 6, kind: input, shape index: {}]
  %s7 = inlined_call_operand.vmem [shape: bf16[2,32,176], index: 7, kind: input, shape index: {}]
  %s8 = inlined_call_operand.hbm [shape: bf16[2,16,96], index: 8, kind: input, shape index: {}]
  %s9 = inlined_call_operand.vmem [shape: bf16[2,32,32], index: 9, kind: input, shape index: {}]
  %s10 = inlined_call_operand.hbm [shape: f32[2,1,32], index: 10, kind: input, shape index: {}]
  %s11 = inlined_call_operand.hbm [shape: bf16[2,32,128], index: 11, kind: input, shape index: {}]
  %s12 = inlined_call_operand.vmem [shape: bf16[2,64,32], index: 12, kind: input, shape index: {}]
  %s13 = inlined_call_operand.hbm [shape: f32[1,32], index: 13, kind: input, shape index: {}]
  %s14 = inlined_call_operand.hbm [shape: f32[16,32], index: 14, kind: output, shape index: {}]
  %s15 = sld [smem:[#allocation0]]
  $region86: #{longlora_forward.1} parent=0
    _
  %s17 = ssub.s32 1, %s15
  %s18 = scalar_select 0, %s17, %s15
  $region1: #{longlora_forward.1} parent=0
    #allocation2 [shape = 'u8[1024]{0}', space=vmem, size = 0x400, scoped, tag = 'input window, operand 6, single buffered']
    #allocation3 [shape = 's32[1]{0}', space=sflag, size = 0x4, scoped, tag = 'scoped memory for longlora_forward.1']
    #allocation4 [shape = 's32[1]{0}', space=sflag, size = 0x4, scoped, tag = 'scoped memory for longlora_forward.1']
    #allocation5 [shape = 'u8[8192]{0}', space=vmem, size = 0x2000, scoped, tag = 'input window, operand 8, single buffered']
    #allocation6 [shape = 's32[1]{0}', space=sflag, size = 0x4, scoped, tag = 'scoped memory for longlora_forward.1']
    #allocation7 [shape = 'u8[1024]{0}', space=vmem, size = 0x400, scoped, tag = 'input window, operand 10, single buffered']
    #allocation8 [shape = 'u8[16384]{0}', space=vmem, size = 0x4000, scoped, tag = 'input window, operand 11, single buffered']
    #allocation9 [shape = 's32[1]{0}', space=sflag, size = 0x4, scoped, tag = 'scoped memory for longlora_forward.1']
    #allocation10 [shape = 'u8[512]{0}', space=vmem, size = 0x400, scoped, tag = 'input window, operand 13, single buffered']
    #allocation11 [shape = 'u8[8192]{0}', space=vmem, size = 0x2000, scoped, tag = 'output window, operand 0, single buffered']
    %19 = vsyncpa [#allocation3], 0
    %20 = vsyncpa [#allocation6], 0
    %21 = vsyncpa [#allocation9], 0
    %22 = vsyncpa [#allocation4], 0
    // Predicated region
    $region2: #{longlora_forward.1} parent=1 // pred_check
      _
    $region3: #{longlora_forward.1} parent=1 // pred_check_branch
      %24 = sbr.rel (0) target = $region5
    $region4: #{longlora_forward.1} parent=1 // pred_region
      _
    $region5: #{longlora_forward.1} parent=1 // pred_fallthru
      _
    // Predicated region
    $region6: #{longlora_forward.1} parent=1 // pred_check
      _
    $region7: #{longlora_forward.1} parent=1 // pred_check_branch
      %26 = sbr.rel (0) target = $region9
    $region8: #{longlora_forward.1} parent=1 // pred_region
      _
    $region9: #{longlora_forward.1} parent=1 // pred_fallthru
      _
    // Predicated region
    $region10: #{longlora_forward.1} parent=1 // pred_check
      _
    $region11: #{longlora_forward.1} parent=1 // pred_check_branch
      %28 = sbr.rel (0) target = $region13
    $region12: #{longlora_forward.1} parent=1 // pred_region
      _
    $region13: #{longlora_forward.1} parent=1 // pred_fallthru
      _
    // Predicated region
    $region14: #{longlora_forward.1} parent=1 // pred_check
      _
    $region15: #{longlora_forward.1} parent=1 // pred_check_branch
      %30 = sbr.rel (0) target = $region17
    $region16: #{longlora_forward.1} parent=1 // pred_region
      _
    $region17: #{longlora_forward.1} parent=1 // pred_fallthru
      _
    // Predicated region
    $region18: #{longlora_forward.1} parent=1 // pred_check
      _
    $region19: #{longlora_forward.1} parent=1 // pred_check_branch
      %32 = sbr.rel (0) target = $region21
    $region20: #{longlora_forward.1} parent=1 // pred_region
      _
    $region21: #{longlora_forward.1} parent=1 // pred_fallthru
      _
    // Predicated region
    $region22: #{longlora_forward.1} parent=1 // pred_check
      _
    $region23: #{longlora_forward.1} parent=1 // pred_check_branch
      %34 = sbr.rel (0) target = $region25
    $region24: #{longlora_forward.1} parent=1 // pred_region
      _
    $region25: #{longlora_forward.1} parent=1 // pred_fallthru
      _
    // Predicated region
    $region26: #{longlora_forward.1} parent=1 // pred_check
      _
    $region27: #{longlora_forward.1} parent=1 // pred_check_branch
      %36 = sbr.rel (0) target = $region29
    $region28: #{longlora_forward.1} parent=1 // pred_region
      %s38 = ssub.s32 32, 32
      %39 = vsyncadd [#allocation3], %s38
      %s40 = sshll.u32 [#allocation2], 4
      %s41 = int_to_ptr.vmem [resolvable:$true] %s40
      %46 = dma.hbm_to_vmem [thread:$0]  %s6, 32, %s41, [#allocation3], 16, 16, 1
    $region29: #{longlora_forward.1} parent=1 // pred_fallthru
      _
    // Predicated region
    $region30: #{longlora_forward.1} parent=1 // pred_check
      _
    $region31: #{longlora_forward.1} parent=1 // pred_check_branch
      %48 = sbr.rel (0) target = $region33
    $region32: #{longlora_forward.1} parent=1 // pred_region
      _
    $region33: #{longlora_forward.1} parent=1 // pred_fallthru
      _
    // Predicated region
    $region34: #{longlora_forward.1} parent=1 // pred_check
      _
    $region35: #{longlora_forward.1} parent=1 // pred_check_branch
      %50 = sbr.rel (0) target = $region37
    $region36: #{longlora_forward.1} parent=1 // pred_region
      %s52 = ssub.s32 256, 256
      %53 = vsyncadd [#allocation6], %s52
      %s54 = sshll.u32 [#allocation5], 4
      %s55 = int_to_ptr.vmem [resolvable:$true] %s54
      %60 = dma.hbm_to_vmem [thread:$0]  %s8, 256, %s55, [#allocation6], 64, 64, 4
    $region37: #{longlora_forward.1} parent=1 // pred_fallthru
      _
    // Predicated region
    $region38: #{longlora_forward.1} parent=1 // pred_check
      _
    $region39: #{longlora_forward.1} parent=1 // pred_check_branch
      %62 = sbr.rel (0) target = $region41
    $region40: #{longlora_forward.1} parent=1 // pred_region
      _
    $region41: #{longlora_forward.1} parent=1 // pred_fallthru
      _
    // Predicated region
    $region42: #{longlora_forward.1} parent=1 // pred_check
      _
    $region43: #{longlora_forward.1} parent=1 // pred_check_branch
      %64 = sbr.rel (0) target = $region45
    $region44: #{longlora_forward.1} parent=1 // pred_region
      %s66 = ssub.s32 32, 32
      %67 = vsyncadd [#allocation6], %s66
      %s68 = sshll.u32 [#allocation7], 4
      %s69 = int_to_ptr.vmem [resolvable:$true] %s68
      %74 = dma.hbm_to_vmem [thread:$0]  %s10, 32, %s69, [#allocation6], 16, 16, 1
    $region45: #{longlora_forward.1} parent=1 // pred_fallthru
      _
    // Predicated region
    $region46: #{longlora_forward.1} parent=1 // pred_check
      _
    $region47: #{longlora_forward.1} parent=1 // pred_check_branch
      %76 = sbr.rel (0) target = $region49
    $region48: #{longlora_forward.1} parent=1 // pred_region
      %s78 = ssub.s32 512, 512
      %79 = vsyncadd [#allocation9], %s78
      %s80 = sshll.u32 [#allocation8], 4
      %s81 = int_to_ptr.vmem [resolvable:$true] %s80
      %86 = dma.hbm_to_vmem [thread:$0]  %s11, 512, %s81, [#allocation9], 64, 64, 4
    $region49: #{longlora_forward.1} parent=1 // pred_fallthru
      _
    // Predicated region
    $region50: #{longlora_forward.1} parent=1 // pred_check
      _
    $region51: #{longlora_forward.1} parent=1 // pred_check_branch
      %88 = sbr.rel (0) target = $region53
    $region52: #{longlora_forward.1} parent=1 // pred_region
      _
    $region53: #{longlora_forward.1} parent=1 // pred_fallthru
      _
    // Predicated region
    $region54: #{longlora_forward.1} parent=1 // pred_check
      _
    $region55: #{longlora_forward.1} parent=1 // pred_check_branch
      %90 = sbr.rel (0) target = $region57
    $region56: #{longlora_forward.1} parent=1 // pred_region
      %s92 = ssub.s32 16, 16
      %93 = vsyncadd [#allocation9], %s92
      %s95 = sshll.u32 [#allocation10], 4
      %s96 = int_to_ptr.vmem [resolvable:$true] %s95
      %98 = dma.hbm_to_vmem [thread:$0]  %s13, 16, %s96, [#allocation9]
    $region57: #{longlora_forward.1} parent=1 // pred_fallthru
      _
    // Predicated region
    $region58: #{longlora_forward.1} parent=1 // pred_check
      _
    $region59: #{longlora_forward.1} parent=1 // pred_check_branch
      %100 = sbr.rel (0) target = $region61
    $region60: #{longlora_forward.1} parent=1 // pred_region
      %101 = dma.done [#allocation3], 32
    $region61: #{longlora_forward.1} parent=1 // pred_fallthru
      _
    // Predicated region
    $region62: #{longlora_forward.1} parent=1 // pred_check
      _
    $region63: #{longlora_forward.1} parent=1 // pred_check_branch
      %103 = sbr.rel (0) target = $region65
    $region64: #{longlora_forward.1} parent=1 // pred_region
      %104 = dma.done [#allocation6], 256
    $region65: #{longlora_forward.1} parent=1 // pred_fallthru
      _
    // Predicated region
    $region66: #{longlora_forward.1} parent=1 // pred_check
      _
    $region67: #{longlora_forward.1} parent=1 // pred_check_branch
      %106 = sbr.rel (0) target = $region69
    $region68: #{longlora_forward.1} parent=1 // pred_region
      %107 = dma.done [#allocation6], 32
    $region69: #{longlora_forward.1} parent=1 // pred_fallthru
      _
    // Predicated region
    $region70: #{longlora_forward.1} parent=1 // pred_check
      _
    $region71: #{longlora_forward.1} parent=1 // pred_check_branch
      %109 = sbr.rel (0) target = $region73
    $region72: #{longlora_forward.1} parent=1 // pred_region
      %110 = dma.done [#allocation9], 512
    $region73: #{longlora_forward.1} parent=1 // pred_fallthru
      _
    // Predicated region
    $region74: #{longlora_forward.1} parent=1 // pred_check
      _
    $region75: #{longlora_forward.1} parent=1 // pred_check_branch
      %112 = sbr.rel (0) target = $region77
    $region76: #{longlora_forward.1} parent=1 // pred_region
      %113 = dma.done [#allocation9], 16
    $region77: #{longlora_forward.1} parent=1 // pred_fallthru
      _
    %v115 = vld [vmem:[%s0] sm:$0xff]
    %v116 = vld [vmem:[%s0 + $0x8] sm:$0xff]
    %v117 = vlaneseq
    %v118 = vand.u32 %v117, 127
    %119 = vset.pattern.permute.xlu0 0
    %120 = vperm.xlu0 %119, %v115
    %v121 = vpop.permute.xlu0 %120
    %122 = vset.pattern.permute.xlu0 0
    %123 = vperm.xlu0 %122, %v116
    %v124 = vpop.permute.xlu0 %123
    %vm125 = vcmp.eq.s32.totalorder %v121, %v118
    %vm126 = vcmp.eq.s32.totalorder %v124, %v118
    %v127 = vsel %vm125, 1, 0
    %v128 = vsel %vm126, 1, 0
    %v129 = vcvt.s32.f32 %v127
    %v130 = vcvt.s32.f32 %v128
    %v131 = vld [vmem:[%s1] sm:$0xff]
    %v132 = vld [vmem:[%s1 + $0x8] sm:$0xff]
    %v133 = vld [vmem:[%s1 + $0x10] sm:$0xff]
    %v134 = vld [vmem:[%s1 + $0x18] sm:$0xff]
    %v135 = vld [vmem:[%s1 + $0x20] sm:$0xff]
    %v136 = vld [vmem:[%s1 + $0x28] sm:$0xff]
    %v137 = vld [vmem:[%s1 + $0x30] sm:$0xff]
    %v138 = vld [vmem:[%s1 + $0x38] sm:$0xff]
    %vm139 = vcmask 523264
    %v141 = vsel %vm139, %v129, 0
    %v144 = vsel %vm139, %v130, 0
    %146 = vmatprep.subr.mxu0 0.0
    %147 = vmatpush1.msra.mxu0 %v131
    %148 = vmatprep.subr.mxu0 0.0
    %149 = vmatpush1.msra.mxu0 %v132
    %150 = vmatprep.subr.mxu0 0.0
    %151 = vmatpush1.msra.mxu0 %v133
    %152 = vmatprep.subr.mxu0 0.0
    %153 = vmatpush1.msra.mxu0 %v134
    %154 = vmatprep.subr.mxu0 0.0
    %155 = vmatpush1.msra.mxu0 %v135
    %156 = vmatprep.subr.mxu0 0.0
    %157 = vmatpush1.msra.mxu0 %v136
    %158 = vmatprep.subr.mxu0 0.0
    %159 = vmatpush1.msra.mxu0 %v137
    %160 = vmatprep.subr.mxu0 0.0
    %161 = vmatpush1.msra.mxu0 %v138
    %162 = vmatprep.subr.mxu0 0.0
    %163 = vmatpush1.msra.mxu0 0.0
    %164 = vmatprep.subr.mxu0 0.0
    %165 = vmatpush1.msra.mxu0 0.0
    %166 = vmatprep.subr.mxu0 0.0
    %167 = vmatpush1.msra.mxu0 0.0
    %168 = vmatprep.subr.mxu0 0.0
    %169 = vmatpush1.msra.mxu0 0.0
    %170 = vmatprep.subr.mxu0 0.0
    %171 = vmatpush1.msra.mxu0 0.0
    %172 = vmatprep.subr.mxu0 0.0
    %173 = vmatpush1.msra.mxu0 0.0
    %174 = vmatprep.subr.mxu0 0.0
    %175 = vmatpush1.msra.mxu0 0.0
    %176 = vmatprep.subr.mxu0 0.0
    %177 = vmatpush1.msra.mxu0 0.0
    %178 = vmatprep.subr.mxu0 0.0
    %179 = vmatpush1.msra.mxu0 0.0
    %180 = vmatprep.subr.mxu0 0.0
    %181 = vmatpush1.msra.mxu0 0.0
    %182 = vmatprep.subr.mxu0 0.0
    %183 = vmatpush1.msra.mxu0 0.0
    %184 = vmatprep.subr.mxu0 0.0
    %185 = vmatpush1.msra.mxu0 0.0
    %186 = vmatprep.subr.mxu0 0.0
    %187 = vmatpush1.msra.mxu0 0.0
    %188 = vmatprep.subr.mxu0 0.0
    %189 = vmatpush1.msra.mxu0 0.0
    %190 = vmatprep.subr.mxu0 0.0
    %191 = vmatpush1.msra.mxu0 0.0
    %192 = vmatprep.subr.mxu0 0.0
    %193 = vmatpush1.msra.mxu0 0.0
    %194 = vmatprep.subr.mxu0 0.0
    %195 = vmatpush1.msra.mxu0 0.0
    %196 = vmatprep.subr.mxu0 0.0
    %197 = vmatpush1.msra.mxu0 0.0
    %198 = vmatprep.subr.mxu0 0.0
    %199 = vmatpush1.msra.mxu0 0.0
    %200 = vmatprep.subr.mxu0 0.0
    %201 = vmatpush1.msra.mxu0 0.0
    %202 = vmatprep.subr.mxu0 0.0
    %203 = vmatpush1.msra.mxu0 0.0
    %204 = vmatprep.subr.mxu0 0.0
    %205 = vmatpush1.msra.mxu0 0.0
    %206 = vmatprep.subr.mxu0 0.0
    %207 = vmatpush1.msra.mxu0 0.0
    %208 = vmatprep.subr.mxu0 0.0
    %209 = vmatpush1.msra.mxu0 0.0
    %210 = vmatprep.mubr.f32.mxu0 0.0
    %211 = vmatmul.mubr.f32.gmra.mrb[0].mxu0 %v141
    %v212 = vpop.f32.mrb[0].mxu0
    %v213 = vadd.f32 0.0, %v212
    %v214 = vpop.f32.mrb[0].mxu0
    %215 = vmatprep.mubr.f32.mxu0 0.0
    %216 = vmatmul.mubr.f32.gmra.mrb[0].mxu0 %v144
    %v217 = vpop.f32.mrb[0].mxu0
    %v218 = vadd.f32 0.0, %v217
    %v219 = vpop.f32.mrb[0].mxu0
    %220 = vdwg.mxu0
    %v221 = vld [vmem:[%s2] sm:$0xff]
    %v222 = vld [vmem:[%s3] sm:$0xff]
    %224 = vrot.lane.b32.xlu0 %v221, 8
    %v225 = vpop.permute.xlu0 %224
    %227 = vrot.lane.b32.xlu0 %v221, 16
    %v228 = vpop.permute.xlu0 %227
    %230 = vrot.lane.b32.xlu0 %v221, 24
    %v231 = vpop.permute.xlu0 %230
    %vm233 = vcmask 64512
    %v234 = vsel %vm233, %v221, %v225
    %vm235 = vcmask 130048
    %v236 = vsel %vm235, %v234, %v228
    %vm237 = vcmask 195584
    %v238 = vsel %vm237, %v236, %v231
    %240 = vrot.lane.b32.xlu0 %v222, 8
    %v241 = vpop.permute.xlu0 %240
    %243 = vrot.lane.b32.xlu0 %v222, 16
    %v244 = vpop.permute.xlu0 %243
    %246 = vrot.lane.b32.xlu0 %v222, 24
    %v247 = vpop.permute.xlu0 %246
    %v249 = vsel %vm233, %v222, %v241
    %v250 = vsel %vm235, %v249, %v244
    %v251 = vsel %vm237, %v250, %v247
    %v252 = vld [vmem:[%s4] sm:$0xff]
    %v253 = vld [vmem:[%s4 + $0x8] sm:$0xff]
    %v254 = vld [vmem:[%s4 + $0x10] sm:$0xff]
    %v255 = vld [vmem:[%s4 + $0x18] sm:$0xff]
    %v256 = vld [vmem:[%s4 + $0x20] sm:$0xff]
    %v257 = vld [vmem:[%s4 + $0x28] sm:$0xff]
    %v258 = vld [vmem:[%s4 + $0x30] sm:$0xff]
    %v259 = vld [vmem:[%s4 + $0x38] sm:$0xff]
    %v260 = vld [vmem:[%s5] sm:$0xff]
    %v261 = vld [vmem:[%s5 + $0x8] sm:$0xff]
    %v262 = vld [vmem:[%s5 + $0x10] sm:$0xff]
    %v263 = vld [vmem:[%s5 + $0x18] sm:$0xff]
    %v264 = vld [vmem:[%s5 + $0x20] sm:$0xff]
    %v265 = vld [vmem:[%s5 + $0x28] sm:$0xff]
    %v266 = vld [vmem:[%s5 + $0x30] sm:$0xff]
    %v267 = vld [vmem:[%s5 + $0x38] sm:$0xff]
    %v268 = vld [vmem:[#allocation2] sm:$0x1]
    %v269 = vmul.f32 %v213, %v213
    %v270 = vmul.f32 %v218, %v218
    %vm271 = vcmask 261120
    %v272 = vsel %vm271, %v269, 0.0
    %273 = vadd.xlane.f32.xlu0 %v272
    %v274 = vpop.xlane.xlu0 %273
    %v275 = vsel %vm271, %v270, 0.0
    %276 = vadd.xlane.f32.xlu0 %v275
    %v277 = vpop.xlane.xlu0 %276
    %v278 = vrcp.pop 32.0
    %v279 = vmul.f32 %v274, %v278
    %v280 = vmul.f32 %v277, %v278
    %v281 = vadd.f32 %v279, 1e-06
    %v282 = vadd.f32 %v280, 1e-06
    %v283 = vrsqrt.pop %v281
    %v284 = vrsqrt.pop %v282
    %v285 = vmul.f32 %v213, %v283
    %v286 = vmul.f32 %v218, %v284
    %v288 = vlaneseq
    %v289 = vshrl.u32 %v288, 7
    %v290 = vsub.s32 0, %v289
    %v291 = vrot.slane %v268, %v290
    %v293 = vmul.f32 %v285, %v291
    %v294 = vmul.f32 %v286, %v291
    %v295 = vpack.c.bf16 %v294, %v293
    %v296 = vld [vmem:[%s7] sm:$0xff]
    %v297 = vld [vmem:[%s7 + $0x8] sm:$0xff]
    %v298 = vld [vmem:[%s7 + $0x10] sm:$0xff]
    %v299 = vld [vmem:[%s7 + $0x18] sm:$0xff]
    %v304 = vunpack.c.l.b16 %v296
    %v305 = vunpack.c.h.b16 %v296
    %v306 = vunpack.c.l.b16 %v297
    %v307 = vunpack.c.h.b16 %v297
    %v308 = vunpack.c.l.b16 %v298
    %v309 = vunpack.c.h.b16 %v298
    %v310 = vunpack.c.l.b16 %v299
    %v311 = vunpack.c.h.b16 %v299
    %v312 = vpack.c.b16 %v306, %v304
    %v313 = vpack.c.b16 %v307, %v305
    %v314 = vpack.c.b16 %v310, %v308
    %v315 = vpack.c.b16 %v311, %v309
    %v321 = vsel %vm271, %v295, 0
    %323 = vmatprep.subr.bf16.mxu0 %v313
    %324 = vmatpush1.bf16.msra.mxu0 %v312
    %325 = vmatprep.subr.bf16.mxu0 %v315
    %326 = vmatpush1.bf16.msra.mxu0 %v314
    %327 = vmatprep.subr.bf16.mxu0 0
    %328 = vmatpush1.bf16.msra.mxu0 0
    %329 = vmatprep.subr.bf16.mxu0 0
    %330 = vmatpush1.bf16.msra.mxu0 0
    %331 = vmatprep.subr.bf16.mxu0 0
    %332 = vmatpush1.bf16.msra.mxu0 0
    %333 = vmatprep.subr.bf16.mxu0 0
    %334 = vmatpush1.bf16.msra.mxu0 0
    %335 = vmatprep.subr.bf16.mxu0 0
    %336 = vmatpush1.bf16.msra.mxu0 0
    %337 = vmatprep.subr.bf16.mxu0 0
    %338 = vmatpush1.bf16.msra.mxu0 0
    %339 = vmatprep.subr.bf16.mxu0 0
    %340 = vmatpush1.bf16.msra.mxu0 0
    %341 = vmatprep.subr.bf16.mxu0 0
    %342 = vmatpush1.bf16.msra.mxu0 0
    %343 = vmatprep.subr.bf16.mxu0 0
    %344 = vmatpush1.bf16.msra.mxu0 0
    %345 = vmatprep.subr.bf16.mxu0 0
    %346 = vmatpush1.bf16.msra.mxu0 0
    %347 = vmatprep.subr.bf16.mxu0 0
    %348 = vmatpush1.bf16.msra.mxu0 0
    %349 = vmatprep.subr.bf16.mxu0 0
    %350 = vmatpush1.bf16.msra.mxu0 0
    %351 = vmatprep.subr.bf16.mxu0 0
    %352 = vmatpush1.bf16.msra.mxu0 0
    %353 = vmatprep.subr.bf16.mxu0 0
    %354 = vmatpush1.bf16.msra.mxu0 0
    %355 = vmatprep.mubr.bf16.mxu0 0
    %356 = vmatmul.mubr.bf16.gmra.mrb[0].mxu0 %v321
    %v357 = vpop.f32.mrb[0].mxu0
    %v358 = vadd.f32 0.0, %v357
    %v359 = vpop.f32.mrb[0].mxu0
    %v360 = vadd.f32 0.0, %v359
    %v361 = vpop.f32.mrb[0].mxu0
    %v362 = vadd.f32 0.0, %v361
    %v363 = vpop.f32.mrb[0].mxu0
    %v364 = vadd.f32 0.0, %v363
    %365 = vdwg.mxu0
    %v366 = vpack.c.bf16 %v364, %v360
    %v367 = vld [vmem:[#allocation5] sm:$0xf]
    %v368 = vld [vmem:[#allocation5 + $0x4] sm:$0xf]
    %370 = vrot.lane.b32.xlu0 %v366, 96
    %v371 = vpop.permute.xlu0 %370
    %v374 = vunpack.c.l.b16 %v367
    %v375 = vunpack.c.l.b16 %v368
    %v376 = vpack.c.b16 %v375, %v374
    %v379 = vsel %vm235, %v371, 0
    %381 = vmatprep.subr.bf16.mxu0 0
    %382 = vmatpush1.bf16.msra.mxu0 %v376
    %383 = vmatprep.subr.bf16.mxu0 0
    %384 = vmatpush1.bf16.msra.mxu0 0
    %385 = vmatprep.subr.bf16.mxu0 0
    %386 = vmatpush1.bf16.msra.mxu0 0
    %387 = vmatprep.subr.bf16.mxu0 0
    %388 = vmatpush1.bf16.msra.mxu0 0
    %389 = vmatprep.subr.bf16.mxu0 0
    %390 = vmatpush1.bf16.msra.mxu0 0
    %391 = vmatprep.subr.bf16.mxu0 0
    %392 = vmatpush1.bf16.msra.mxu0 0
    %393 = vmatprep.subr.bf16.mxu0 0
    %394 = vmatpush1.bf16.msra.mxu0 0
    %395 = vmatprep.subr.bf16.mxu0 0
    %396 = vmatpush1.bf16.msra.mxu0 0
    %397 = vmatprep.subr.bf16.mxu0 0
    %398 = vmatpush1.bf16.msra.mxu0 0
    %399 = vmatprep.subr.bf16.mxu0 0
    %400 = vmatpush1.bf16.msra.mxu0 0
    %401 = vmatprep.subr.bf16.mxu0 0
    %402 = vmatpush1.bf16.msra.mxu0 0
    %403 = vmatprep.subr.bf16.mxu0 0
    %404 = vmatpush1.bf16.msra.mxu0 0
    %405 = vmatprep.subr.bf16.mxu0 0
    %406 = vmatpush1.bf16.msra.mxu0 0
    %407 = vmatprep.subr.bf16.mxu0 0
    %408 = vmatpush1.bf16.msra.mxu0 0
    %409 = vmatprep.subr.bf16.mxu0 0
    %410 = vmatpush1.bf16.msra.mxu0 0
    %411 = vmatprep.subr.bf16.mxu0 0
    %412 = vmatpush1.bf16.msra.mxu0 0
    %413 = vmatprep.mubr.bf16.mxu0 0
    %414 = vmatmul.mubr.bf16.gmra.mrb[0].mxu0 %v379
    %v415 = vpop.f32.mrb[0].mxu0
    %v416 = vadd.f32 0.0, %v415
    %v417 = vpop.f32.mrb[0].mxu0
    %v418 = vpop.f32.mrb[0].mxu0
    %v419 = vadd.f32 0.0, %v418
    %v420 = vpop.f32.mrb[0].mxu0
    %421 = vdwg.mxu0
    %v422 = vadd.f32 %v358, %v416
    %v423 = vadd.f32 %v362, %v419
    %v424 = vmul.f32 %v422, %v238
    %v425 = vmul.f32 %v423, %v238
    %427 = vrot.lane.b32.xlu0 %v251, 64
    %v428 = vpop.permute.xlu0 %427
    %v430 = vmul.f32 %v422, %v428
    %v431 = vmul.f32 %v423, %v428
    %434 = vrot.lane.b32.xlu0 %v430, 64
    %v435 = vpop.permute.xlu0 %434
    %436 = vrot.lane.b32.xlu0 %v431, 64
    %v437 = vpop.permute.xlu0 %436
    %v440 = vadd.f32 %v424, %v435
    %v441 = vadd.f32 %v425, %v437
    %443 = vrot.lane.b32.xlu0 %v238, 96
    %v444 = vpop.permute.xlu0 %443
    %v446 = vmul.f32 %v358, %v444
    %v447 = vmul.f32 %v362, %v444
    %v448 = vmul.f32 %v360, %v251
    %v449 = vmul.f32 %v364, %v251
    %452 = vrot.lane.b32.xlu0 %v448, 96
    %v453 = vpop.permute.xlu0 %452
    %454 = vrot.lane.b32.xlu0 %v449, 96
    %v455 = vpop.permute.xlu0 %454
    %v458 = vadd.f32 %v446, %v453
    %v459 = vadd.f32 %v447, %v455
    %v460 = vmul.f32 %v440, %v252
    %v461 = vmul.f32 %v441, %v253
    %v462 = vmul.f32 %v440, %v254
    %v463 = vmul.f32 %v441, %v255
    %v464 = vmul.f32 %v440, %v256
    %v465 = vmul.f32 %v441, %v257
    %v466 = vmul.f32 %v440, %v258
    %v467 = vmul.f32 %v441, %v259
    %v468 = vpack.c.bf16 %v461, %v460
    %v469 = vpack.c.bf16 %v463, %v462
    %v470 = vpack.c.bf16 %v465, %v464
    %v471 = vpack.c.bf16 %v467, %v466
    %v472 = vpack.c.bf16 %v459, %v458
    %474 = vrot.lane.b32.xlu0 %v472, 32
    %v475 = vpop.permute.xlu0 %474
    %v477 = vsel %vm271, %v468, 0
    %v480 = vsel %vm271, %v469, 0
    %v483 = vsel %vm271, %v470, 0
    %v486 = vsel %vm271, %v471, 0
    %v489 = vsel %vm271, %v475, 0
    %491 = vmatprep.subr.bf16.mxu0 0
    %492 = vmatpush1.bf16.xpose.msra.mxu0 %v489
    %493 = vmatprep.subr.bf16.mxu0 0
    %494 = vmatpush1.bf16.xpose.msra.mxu0 0
    %495 = vmatprep.subr.bf16.mxu0 0
    %496 = vmatpush1.bf16.xpose.msra.mxu0 0
    %497 = vmatprep.subr.bf16.mxu0 0
    %498 = vmatpush1.bf16.xpose.msra.mxu0 0
    %499 = vmatprep.subr.bf16.mxu0 0
    %500 = vmatpush1.bf16.xpose.msra.mxu0 0
    %501 = vmatprep.subr.bf16.mxu0 0
    %502 = vmatpush1.bf16.xpose.msra.mxu0 0
    %503 = vmatprep.subr.bf16.mxu0 0
    %504 = vmatpush1.bf16.xpose.msra.mxu0 0
    %505 = vmatprep.subr.bf16.mxu0 0
    %506 = vmatpush1.bf16.xpose.msra.mxu0 0
    %507 = vmatprep.subr.bf16.mxu0 0
    %508 = vmatpush1.bf16.xpose.msra.mxu0 0
    %509 = vmatprep.subr.bf16.mxu0 0
    %510 = vmatpush1.bf16.xpose.msra.mxu0 0
    %511 = vmatprep.subr.bf16.mxu0 0
    %512 = vmatpush1.bf16.xpose.msra.mxu0 0
    %513 = vmatprep.subr.bf16.mxu0 0
    %514 = vmatpush1.bf16.xpose.msra.mxu0 0
    %515 = vmatprep.subr.bf16.mxu0 0
    %516 = vmatpush1.bf16.xpose.msra.mxu0 0
    %517 = vmatprep.subr.bf16.mxu0 0
    %518 = vmatpush1.bf16.xpose.msra.mxu0 0
    %519 = vmatprep.subr.bf16.mxu0 0
    %520 = vmatpush1.bf16.xpose.msra.mxu0 0
    %521 = vmatprep.subr.bf16.mxu0 0
    %522 = vmatpush1.bf16.xpose.msra.mxu0 0
    %523 = vmatprep.mubr.bf16.mxu0 0
    %524 = vmatmul.mubr.bf16.gmra.mrb[0].mxu0 %v477
    %v525 = vpop.f32.mrb[0].mxu0
    %v526 = vadd.f32 %v260, %v525
    %v527 = vpop.f32.mrb[0].mxu0
    %v528 = vpop.f32.mrb[0].mxu0
    %v529 = vadd.f32 %v261, %v528
    %v530 = vpop.f32.mrb[0].mxu0
    %531 = vmatprep.mubr.bf16.mxu0 0
    %532 = vmatmul.mubr.bf16.gmra.mrb[0].mxu0 %v480
    %v533 = vpop.f32.mrb[0].mxu0
    %v534 = vadd.f32 %v262, %v533
    %v535 = vpop.f32.mrb[0].mxu0
    %v536 = vpop.f32.mrb[0].mxu0
    %v537 = vadd.f32 %v263, %v536
    %v538 = vpop.f32.mrb[0].mxu0
    %539 = vmatprep.mubr.bf16.mxu0 0
    %540 = vmatmul.mubr.bf16.gmra.mrb[0].mxu0 %v483
    %v541 = vpop.f32.mrb[0].mxu0
    %v542 = vadd.f32 %v264, %v541
    %v543 = vpop.f32.mrb[0].mxu0
    %v544 = vpop.f32.mrb[0].mxu0
    %v545 = vadd.f32 %v265, %v544
    %v546 = vpop.f32.mrb[0].mxu0
    %547 = vmatprep.mubr.bf16.mxu0 0
    %548 = vmatmul.mubr.bf16.gmra.mrb[0].mxu0 %v486
    %v549 = vpop.f32.mrb[0].mxu0
    %v550 = vadd.f32 %v266, %v549
    %v551 = vpop.f32.mrb[0].mxu0
    %v552 = vpop.f32.mrb[0].mxu0
    %v553 = vadd.f32 %v267, %v552
    %v554 = vpop.f32.mrb[0].mxu0
    %555 = vdwg.mxu0
    %v556 = vsel %vm235, %v526, -inf
    %557 = vmax.xlane.f32.xlu0 %v556
    %v558 = vpop.xlane.xlu0 %557
    %v559 = vsel %vm235, %v529, -inf
    %560 = vmax.xlane.f32.xlu0 %v559
    %v561 = vpop.xlane.xlu0 %560
    %v562 = vsel %vm235, %v534, -inf
    %563 = vmax.xlane.f32.xlu0 %v562
    %v564 = vpop.xlane.xlu0 %563
    %v565 = vsel %vm235, %v537, -inf
    %566 = vmax.xlane.f32.xlu0 %v565
    %v567 = vpop.xlane.xlu0 %566
    %v568 = vsel %vm235, %v542, -inf
    %569 = vmax.xlane.f32.xlu0 %v568
    %v570 = vpop.xlane.xlu0 %569
    %v571 = vsel %vm235, %v545, -inf
    %572 = vmax.xlane.f32.xlu0 %v571
    %v573 = vpop.xlane.xlu0 %572
    %v574 = vsel %vm235, %v550, -inf
    %575 = vmax.xlane.f32.xlu0 %v574
    %v576 = vpop.xlane.xlu0 %575
    %v577 = vsel %vm235, %v553, -inf
    %578 = vmax.xlane.f32.xlu0 %v577
    %v579 = vpop.xlane.xlu0 %578
    %v580 = vsub.f32 %v526, %v558
    %v581 = vsub.f32 %v529, %v561
    %v582 = vsub.f32 %v534, %v564
    %v583 = vsub.f32 %v537, %v567
    %v584 = vsub.f32 %v542, %v570
    %v585 = vsub.f32 %v545, %v573
    %v586 = vsub.f32 %v550, %v576
    %v587 = vsub.f32 %v553, %v579
    %v588 = vmul.f32 %v580, 1.442695
    %v589 = vpow.pop %v588
    %v590 = vmul.f32 %v581, 1.442695
    %v591 = vpow.pop %v590
    %v592 = vmul.f32 %v582, 1.442695
    %v593 = vpow.pop %v592
    %v594 = vmul.f32 %v583, 1.442695
    %v595 = vpow.pop %v594
    %v596 = vmul.f32 %v584, 1.442695
    %v597 = vpow.pop %v596
    %v598 = vmul.f32 %v585, 1.442695
    %v599 = vpow.pop %v598
    %v600 = vmul.f32 %v586, 1.442695
    %v601 = vpow.pop %v600
    %v602 = vmul.f32 %v587, 1.442695
    %v603 = vpow.pop %v602
    %v604 = vsel %vm235, %v589, 0.0
    %605 = vadd.xlane.f32.xlu0 %v604
    %v606 = vpop.xlane.xlu0 %605
    %v607 = vsel %vm235, %v591, 0.0
    %608 = vadd.xlane.f32.xlu0 %v607
    %v609 = vpop.xlane.xlu0 %608
    %v610 = vsel %vm235, %v593, 0.0
    %611 = vadd.xlane.f32.xlu0 %v610
    %v612 = vpop.xlane.xlu0 %611
    %v613 = vsel %vm235, %v595, 0.0
    %614 = vadd.xlane.f32.xlu0 %v613
    %v615 = vpop.xlane.xlu0 %614
    %v616 = vsel %vm235, %v597, 0.0
    %617 = vadd.xlane.f32.xlu0 %v616
    %v618 = vpop.xlane.xlu0 %617
    %v619 = vsel %vm235, %v599, 0.0
    %620 = vadd.xlane.f32.xlu0 %v619
    %v621 = vpop.xlane.xlu0 %620
    %v622 = vsel %vm235, %v601, 0.0
    %623 = vadd.xlane.f32.xlu0 %v622
    %v624 = vpop.xlane.xlu0 %623
    %v625 = vsel %vm235, %v603, 0.0
    %626 = vadd.xlane.f32.xlu0 %v625
    %v627 = vpop.xlane.xlu0 %626
    %v628 = vrcp.pop %v606
    %v629 = vmul.f32 %v589, %v628
    %v630 = vrcp.pop %v609
    %v631 = vmul.f32 %v591, %v630
    %v632 = vrcp.pop %v612
    %v633 = vmul.f32 %v593, %v632
    %v634 = vrcp.pop %v615
    %v635 = vmul.f32 %v595, %v634
    %v636 = vrcp.pop %v618
    %v637 = vmul.f32 %v597, %v636
    %v638 = vrcp.pop %v621
    %v639 = vmul.f32 %v599, %v638
    %v640 = vrcp.pop %v624
    %v641 = vmul.f32 %v601, %v640
    %v642 = vrcp.pop %v627
    %v643 = vmul.f32 %v603, %v642
    %v644 = vpack.c.bf16 %v631, %v629
    %v645 = vpack.c.bf16 %v635, %v633
    %v646 = vpack.c.bf16 %v639, %v637
    %v647 = vpack.c.bf16 %v643, %v641
    %v648 = vpack.c.bf16 %v423, %v422
    %650 = vrot.lane.b32.xlu0 %v648, 96
    %v651 = vpop.permute.xlu0 %650
    %v654 = vsel %vm235, %v644, 0
    %v657 = vsel %vm235, %v645, 0
    %v660 = vsel %vm235, %v646, 0
    %v663 = vsel %vm235, %v647, 0
    %665 = vmatprep.subr.bf16.mxu0 0
    %666 = vmatpush1.bf16.msra.mxu0 %v651
    %667 = vmatprep.subr.bf16.mxu0 0
    %668 = vmatpush1.bf16.msra.mxu0 0
    %669 = vmatprep.subr.bf16.mxu0 0
    %670 = vmatpush1.bf16.msra.mxu0 0
    %671 = vmatprep.subr.bf16.mxu0 0
    %672 = vmatpush1.bf16.msra.mxu0 0
    %673 = vmatprep.subr.bf16.mxu0 0
    %674 = vmatpush1.bf16.msra.mxu0 0
    %675 = vmatprep.subr.bf16.mxu0 0
    %676 = vmatpush1.bf16.msra.mxu0 0
    %677 = vmatprep.subr.bf16.mxu0 0
    %678 = vmatpush1.bf16.msra.mxu0 0
    %679 = vmatprep.subr.bf16.mxu0 0
    %680 = vmatpush1.bf16.msra.mxu0 0
    %681 = vmatprep.subr.bf16.mxu0 0
    %682 = vmatpush1.bf16.msra.mxu0 0
    %683 = vmatprep.subr.bf16.mxu0 0
    %684 = vmatpush1.bf16.msra.mxu0 0
    %685 = vmatprep.subr.bf16.mxu0 0
    %686 = vmatpush1.bf16.msra.mxu0 0
    %687 = vmatprep.subr.bf16.mxu0 0
    %688 = vmatpush1.bf16.msra.mxu0 0
    %689 = vmatprep.subr.bf16.mxu0 0
    %690 = vmatpush1.bf16.msra.mxu0 0
    %691 = vmatprep.subr.bf16.mxu0 0
    %692 = vmatpush1.bf16.msra.mxu0 0
    %693 = vmatprep.subr.bf16.mxu0 0
    %694 = vmatpush1.bf16.msra.mxu0 0
    %695 = vmatprep.subr.bf16.mxu0 0
    %696 = vmatpush1.bf16.msra.mxu0 0
    %697 = vmatprep.mubr.bf16.mxu0 0
    %698 = vmatmul.mubr.bf16.gmra.mrb[0].mxu0 %v654
    %v699 = vpop.f32.mrb[0].mxu0
    %v700 = vadd.f32 0.0, %v699
    %v701 = vpop.f32.mrb[0].mxu0
    %v702 = vpop.f32.mrb[0].mxu0
    %v703 = vadd.f32 0.0, %v702
    %v704 = vpop.f32.mrb[0].mxu0
    %705 = vmatprep.mubr.bf16.mxu0 0
    %706 = vmatmul.mubr.bf16.gmra.mrb[0].mxu0 %v657
    %v707 = vpop.f32.mrb[0].mxu0
    %v708 = vadd.f32 0.0, %v707
    %v709 = vpop.f32.mrb[0].mxu0
    %v710 = vpop.f32.mrb[0].mxu0
    %v711 = vadd.f32 0.0, %v710
    %v712 = vpop.f32.mrb[0].mxu0
    %713 = vmatprep.mubr.bf16.mxu0 0
    %714 = vmatmul.mubr.bf16.gmra.mrb[0].mxu0 %v660
    %v715 = vpop.f32.mrb[0].mxu0
    %v716 = vadd.f32 0.0, %v715
    %v717 = vpop.f32.mrb[0].mxu0
    %v718 = vpop.f32.mrb[0].mxu0
    %v719 = vadd.f32 0.0, %v718
    %v720 = vpop.f32.mrb[0].mxu0
    %721 = vmatprep.mubr.bf16.mxu0 0
    %722 = vmatmul.mubr.bf16.gmra.mrb[0].mxu0 %v663
    %v723 = vpop.f32.mrb[0].mxu0
    %v724 = vadd.f32 0.0, %v723
    %v725 = vpop.f32.mrb[0].mxu0
    %v726 = vpop.f32.mrb[0].mxu0
    %v727 = vadd.f32 0.0, %v726
    %v728 = vpop.f32.mrb[0].mxu0
    %729 = vdwg.mxu0
    %v730 = vmul.f32 %v700, %v252
    %v731 = vmul.f32 %v703, %v253
    %v732 = vmul.f32 %v708, %v254
    %v733 = vmul.f32 %v711, %v255
    %v734 = vmul.f32 %v716, %v256
    %v735 = vmul.f32 %v719, %v257
    %v736 = vmul.f32 %v724, %v258
    %v737 = vmul.f32 %v727, %v259
    %v738 = vadd.f32 %v730, %v732
    %v739 = vadd.f32 %v731, %v733
    %v740 = vadd.f32 %v738, %v734
    %v741 = vadd.f32 %v739, %v735
    %v742 = vadd.f32 %v740, %v736
    %v743 = vadd.f32 %v741, %v737
    %v744 = vpack.c.bf16 %v743, %v742
    %v745 = vld [vmem:[%s9] sm:$0xf]
    %v746 = vld [vmem:[%s9 + $0x4] sm:$0xf]
    %v747 = vld [vmem:[%s9 + $0x8] sm:$0xf]
    %v748 = vld [vmem:[%s9 + $0xc] sm:$0xf]
    %v753 = vunpack.c.l.b16 %v745
    %v754 = vunpack.c.l.b16 %v746
    %v755 = vunpack.c.l.b16 %v747
    %v756 = vunpack.c.l.b16 %v748
    %v757 = vpack.c.b16 %v754, %v753
    %v758 = vpack.c.b16 %v756, %v755
    %v762 = vsel %vm271, %v744, 0
    %764 = vmatprep.subr.bf16.mxu0 0
    %765 = vmatpush1.bf16.msra.mxu0 %v757
    %766 = vmatprep.subr.bf16.mxu0 0
    %767 = vmatpush1.bf16.msra.mxu0 %v758
    %768 = vmatprep.subr.bf16.mxu0 0
    %769 = vmatpush1.bf16.msra.mxu0 0
    %770 = vmatprep.subr.bf16.mxu0 0
    %771 = vmatpush1.bf16.msra.mxu0 0
    %772 = vmatprep.subr.bf16.mxu0 0
    %773 = vmatpush1.bf16.msra.mxu0 0
    %774 = vmatprep.subr.bf16.mxu0 0
    %775 = vmatpush1.bf16.msra.mxu0 0
    %776 = vmatprep.subr.bf16.mxu0 0
    %777 = vmatpush1.bf16.msra.mxu0 0
    %778 = vmatprep.subr.bf16.mxu0 0
    %779 = vmatpush1.bf16.msra.mxu0 0
    %780 = vmatprep.subr.bf16.mxu0 0
    %781 = vmatpush1.bf16.msra.mxu0 0
    %782 = vmatprep.subr.bf16.mxu0 0
    %783 = vmatpush1.bf16.msra.mxu0 0
    %784 = vmatprep.subr.bf16.mxu0 0
    %785 = vmatpush1.bf16.msra.mxu0 0
    %786 = vmatprep.subr.bf16.mxu0 0
    %787 = vmatpush1.bf16.msra.mxu0 0
    %788 = vmatprep.subr.bf16.mxu0 0
    %789 = vmatpush1.bf16.msra.mxu0 0
    %790 = vmatprep.subr.bf16.mxu0 0
    %791 = vmatpush1.bf16.msra.mxu0 0
    %792 = vmatprep.subr.bf16.mxu0 0
    %793 = vmatpush1.bf16.msra.mxu0 0
    %794 = vmatprep.subr.bf16.mxu0 0
    %795 = vmatpush1.bf16.msra.mxu0 0
    %796 = vmatprep.mubr.bf16.mxu0 0
    %797 = vmatmul.mubr.bf16.gmra.mrb[0].mxu0 %v762
    %v798 = vpop.f32.mrb[0].mxu0
    %v799 = vadd.f32 0.0, %v798
    %v800 = vpop.f32.mrb[0].mxu0
    %v801 = vpop.f32.mrb[0].mxu0
    %v802 = vadd.f32 0.0, %v801
    %v803 = vpop.f32.mrb[0].mxu0
    %804 = vdwg.mxu0
    %v805 = vadd.f32 %v213, %v799
    %v806 = vadd.f32 %v218, %v802
    %v807 = vld [vmem:[#allocation7] sm:$0x1]
    %v808 = vmul.f32 %v805, %v805
    %v809 = vmul.f32 %v806, %v806
    %v810 = vsel %vm271, %v808, 0.0
    %811 = vadd.xlane.f32.xlu0 %v810
    %v812 = vpop.xlane.xlu0 %811
    %v813 = vsel %vm271, %v809, 0.0
    %814 = vadd.xlane.f32.xlu0 %v813
    %v815 = vpop.xlane.xlu0 %814
    %v816 = vmul.f32 %v812, %v278
    %v817 = vmul.f32 %v815, %v278
    %v818 = vadd.f32 %v816, 1e-06
    %v819 = vadd.f32 %v817, 1e-06
    %v820 = vrsqrt.pop %v818
    %v821 = vrsqrt.pop %v819
    %v822 = vmul.f32 %v805, %v820
    %v823 = vmul.f32 %v806, %v821
    %v825 = vlaneseq
    %v826 = vshrl.u32 %v825, 7
    %v827 = vsub.s32 0, %v826
    %v828 = vrot.slane %v807, %v827
    %v830 = vmul.f32 %v822, %v828
    %v831 = vmul.f32 %v823, %v828
    %v832 = vpack.c.bf16 %v831, %v830
    %v833 = vld [vmem:[#allocation8] sm:$0xf]
    %v834 = vld [vmem:[#allocation8 + $0x4] sm:$0xf]
    %v835 = vld [vmem:[#allocation8 + $0x8] sm:$0xf]
    %v836 = vld [vmem:[#allocation8 + $0xc] sm:$0xf]
    %v841 = vunpack.c.l.b16 %v833
    %v842 = vunpack.c.l.b16 %v834
    %v843 = vunpack.c.l.b16 %v835
    %v844 = vunpack.c.l.b16 %v836
    %v845 = vpack.c.b16 %v842, %v841
    %v846 = vpack.c.b16 %v844, %v843
    %v850 = vsel %vm271, %v832, 0
    %852 = vmatprep.subr.bf16.mxu0 0
    %853 = vmatpush1.bf16.msra.mxu0 %v845
    %854 = vmatprep.subr.bf16.mxu0 0
    %855 = vmatpush1.bf16.msra.mxu0 %v846
    %856 = vmatprep.subr.bf16.mxu0 0
    %857 = vmatpush1.bf16.msra.mxu0 0
    %858 = vmatprep.subr.bf16.mxu0 0
    %859 = vmatpush1.bf16.msra.mxu0 0
    %860 = vmatprep.subr.bf16.mxu0 0
    %861 = vmatpush1.bf16.msra.mxu0 0
    %862 = vmatprep.subr.bf16.mxu0 0
    %863 = vmatpush1.bf16.msra.mxu0 0
    %864 = vmatprep.subr.bf16.mxu0 0
    %865 = vmatpush1.bf16.msra.mxu0 0
    %866 = vmatprep.subr.bf16.mxu0 0
    %867 = vmatpush1.bf16.msra.mxu0 0
    %868 = vmatprep.subr.bf16.mxu0 0
    %869 = vmatpush1.bf16.msra.mxu0 0
    %870 = vmatprep.subr.bf16.mxu0 0
    %871 = vmatpush1.bf16.msra.mxu0 0
    %872 = vmatprep.subr.bf16.mxu0 0
    %873 = vmatpush1.bf16.msra.mxu0 0
    %874 = vmatprep.subr.bf16.mxu0 0
    %875 = vmatpush1.bf16.msra.mxu0 0
    %876 = vmatprep.subr.bf16.mxu0 0
    %877 = vmatpush1.bf16.msra.mxu0 0
    %878 = vmatprep.subr.bf16.mxu0 0
    %879 = vmatpush1.bf16.msra.mxu0 0
    %880 = vmatprep.subr.bf16.mxu0 0
    %881 = vmatpush1.bf16.msra.mxu0 0
    %882 = vmatprep.subr.bf16.mxu0 0
    %883 = vmatpush1.bf16.msra.mxu0 0
    %884 = vmatprep.mubr.bf16.mxu0 0
    %885 = vmatmul.mubr.bf16.gmra.mrb[0].mxu0 %v850
    %v886 = vpop.f32.mrb[0].mxu0
    %v887 = vadd.f32 0.0, %v886
    %v888 = vpop.f32.mrb[0].mxu0
    %v889 = vpop.f32.mrb[0].mxu0
    %v890 = vadd.f32 0.0, %v889
    %v891 = vpop.f32.mrb[0].mxu0
    %892 = vdwg.mxu0
    %v893 = vsub.f32 0.0, %v887
    %v894 = vsub.f32 0.0, %v890
    %v895 = vmul.f32 %v893, 1.442695
    %v896 = vpow.pop %v895
    %v897 = vmul.f32 %v894, 1.442695
    %v898 = vpow.pop %v897
    %v899 = vadd.f32 %v896, 1.0
    %v900 = vadd.f32 %v898, 1.0
    %v901 = vrcp.pop %v899
    %v902 = vmul.f32 1.0, %v901
    %v903 = vrcp.pop %v900
    %v904 = vmul.f32 1.0, %v903
    %v905 = vmul.f32 %v887, %v902
    %v906 = vmul.f32 %v890, %v904
    %909 = vrot.lane.b32.xlu0 %v887, 64
    %v910 = vpop.permute.xlu0 %909
    %911 = vrot.lane.b32.xlu0 %v890, 64
    %v912 = vpop.permute.xlu0 %911
    %v915 = vmul.f32 %v905, %v910
    %v916 = vmul.f32 %v906, %v912
    %v917 = vpack.c.bf16 %v916, %v915
    %v918 = vld [vmem:[%s12] sm:$0xf]
    %v919 = vld [vmem:[%s12 + $0x4] sm:$0xf]
    %v920 = vld [vmem:[%s12 + $0x8] sm:$0xf]
    %v921 = vld [vmem:[%s12 + $0xc] sm:$0xf]
    %v922 = vld [vmem:[%s12 + $0x10] sm:$0xf]
    %v923 = vld [vmem:[%s12 + $0x14] sm:$0xf]
    %v924 = vld [vmem:[%s12 + $0x18] sm:$0xf]
    %v925 = vld [vmem:[%s12 + $0x1c] sm:$0xf]
    %v934 = vunpack.c.l.b16 %v918
    %v935 = vunpack.c.l.b16 %v919
    %v936 = vunpack.c.l.b16 %v920
    %v937 = vunpack.c.l.b16 %v921
    %v938 = vunpack.c.l.b16 %v922
    %v939 = vunpack.c.l.b16 %v923
    %v940 = vunpack.c.l.b16 %v924
    %v941 = vunpack.c.l.b16 %v925
    %v942 = vpack.c.b16 %v935, %v934
    %v943 = vpack.c.b16 %v937, %v936
    %v944 = vpack.c.b16 %v939, %v938
    %v945 = vpack.c.b16 %v941, %v940
    %v951 = vsel %vm139, %v917, 0
    %953 = vmatprep.subr.bf16.mxu0 0
    %954 = vmatpush1.bf16.msra.mxu0 %v942
    %955 = vmatprep.subr.bf16.mxu0 0
    %956 = vmatpush1.bf16.msra.mxu0 %v943
    %957 = vmatprep.subr.bf16.mxu0 0
    %958 = vmatpush1.bf16.msra.mxu0 %v944
    %959 = vmatprep.subr.bf16.mxu0 0
    %960 = vmatpush1.bf16.msra.mxu0 %v945
    %961 = vmatprep.subr.bf16.mxu0 0
    %962 = vmatpush1.bf16.msra.mxu0 0
    %963 = vmatprep.subr.bf16.mxu0 0
    %964 = vmatpush1.bf16.msra.mxu0 0
    %965 = vmatprep.subr.bf16.mxu0 0
    %966 = vmatpush1.bf16.msra.mxu0 0
    %967 = vmatprep.subr.bf16.mxu0 0
    %968 = vmatpush1.bf16.msra.mxu0 0
    %969 = vmatprep.subr.bf16.mxu0 0
    %970 = vmatpush1.bf16.msra.mxu0 0
    %971 = vmatprep.subr.bf16.mxu0 0
    %972 = vmatpush1.bf16.msra.mxu0 0
    %973 = vmatprep.subr.bf16.mxu0 0
    %974 = vmatpush1.bf16.msra.mxu0 0
    %975 = vmatprep.subr.bf16.mxu0 0
    %976 = vmatpush1.bf16.msra.mxu0 0
    %977 = vmatprep.subr.bf16.mxu0 0
    %978 = vmatpush1.bf16.msra.mxu0 0
    %979 = vmatprep.subr.bf16.mxu0 0
    %980 = vmatpush1.bf16.msra.mxu0 0
    %981 = vmatprep.subr.bf16.mxu0 0
    %982 = vmatpush1.bf16.msra.mxu0 0
    %983 = vmatprep.subr.bf16.mxu0 0
    %984 = vmatpush1.bf16.msra.mxu0 0
    %985 = vmatprep.mubr.bf16.mxu0 0
    %986 = vmatmul.mubr.bf16.gmra.mrb[0].mxu0 %v951
    %v987 = vpop.f32.mrb[0].mxu0
    %v988 = vadd.f32 0.0, %v987
    %v989 = vpop.f32.mrb[0].mxu0
    %v990 = vpop.f32.mrb[0].mxu0
    %v991 = vadd.f32 0.0, %v990
    %v992 = vpop.f32.mrb[0].mxu0
    %993 = vdwg.mxu0
    %v994 = vadd.f32 %v805, %v988
    %v995 = vadd.f32 %v806, %v991
    %s996 = scalar_lea.vmem [#allocation2], 1
    %v997 = vld [vmem:[%s996] sm:$0x1]
    %v998 = vmul.f32 %v994, %v994
    %v999 = vmul.f32 %v995, %v995
    %v1000 = vsel %vm271, %v998, 0.0
    %1001 = vadd.xlane.f32.xlu0 %v1000
    %v1002 = vpop.xlane.xlu0 %1001
    %v1003 = vsel %vm271, %v999, 0.0
    %1004 = vadd.xlane.f32.xlu0 %v1003
    %v1005 = vpop.xlane.xlu0 %1004
    %v1006 = vmul.f32 %v1002, %v278
    %v1007 = vmul.f32 %v1005, %v278
    %v1008 = vadd.f32 %v1006, 1e-06
    %v1009 = vadd.f32 %v1007, 1e-06
    %v1010 = vrsqrt.pop %v1008
    %v1011 = vrsqrt.pop %v1009
    %v1012 = vmul.f32 %v994, %v1010
    %v1013 = vmul.f32 %v995, %v1011
    %v1015 = vlaneseq
    %v1016 = vshrl.u32 %v1015, 7
    %v1017 = vsub.s32 0, %v1016
    %v1018 = vrot.slane %v997, %v1017
    %v1020 = vmul.f32 %v1012, %v1018
    %v1021 = vmul.f32 %v1013, %v1018
    %v1022 = vpack.c.bf16 %v1021, %v1020
    %s1023 = scalar_lea.vmem %s7, 32
    %v1024 = vld [vmem:[%s1023] sm:$0xff]
    %v1025 = vld [vmem:[%s1023 + $0x8] sm:$0xff]
    %v1026 = vld [vmem:[%s1023 + $0x10] sm:$0xff]
    %v1027 = vld [vmem:[%s1023 + $0x18] sm:$0xff]
    %v1032 = vunpack.c.l.b16 %v1024
    %v1033 = vunpack.c.h.b16 %v1024
    %v1034 = vunpack.c.l.b16 %v1025
    %v1035 = vunpack.c.h.b16 %v1025
    %v1036 = vunpack.c.l.b16 %v1026
    %v1037 = vunpack.c.h.b16 %v1026
    %v1038 = vunpack.c.l.b16 %v1027
    %v1039 = vunpack.c.h.b16 %v1027
    %v1040 = vpack.c.b16 %v1034, %v1032
    %v1041 = vpack.c.b16 %v1035, %v1033
    %v1042 = vpack.c.b16 %v1038, %v1036
    %v1043 = vpack.c.b16 %v1039, %v1037
    %v1049 = vsel %vm271, %v1022, 0
    %1051 = vmatprep.subr.bf16.mxu0 %v1041
    %1052 = vmatpush1.bf16.msra.mxu0 %v1040
    %1053 = vmatprep.subr.bf16.mxu0 %v1043
    %1054 = vmatpush1.bf16.msra.mxu0 %v1042
    %1055 = vmatprep.subr.bf16.mxu0 0
    %1056 = vmatpush1.bf16.msra.mxu0 0
    %1057 = vmatprep.subr.bf16.mxu0 0
    %1058 = vmatpush1.bf16.msra.mxu0 0
    %1059 = vmatprep.subr.bf16.mxu0 0
    %1060 = vmatpush1.bf16.msra.mxu0 0
    %1061 = vmatprep.subr.bf16.mxu0 0
    %1062 = vmatpush1.bf16.msra.mxu0 0
    %1063 = vmatprep.subr.bf16.mxu0 0
    %1064 = vmatpush1.bf16.msra.mxu0 0
    %1065 = vmatprep.subr.bf16.mxu0 0
    %1066 = vmatpush1.bf16.msra.mxu0 0
    %1067 = vmatprep.subr.bf16.mxu0 0
    %1068 = vmatpush1.bf16.msra.mxu0 0
    %1069 = vmatprep.subr.bf16.mxu0 0
    %1070 = vmatpush1.bf16.msra.mxu0 0
    %1071 = vmatprep.subr.bf16.mxu0 0
    %1072 = vmatpush1.bf16.msra.mxu0 0
    %1073 = vmatprep.subr.bf16.mxu0 0
    %1074 = vmatpush1.bf16.msra.mxu0 0
    %1075 = vmatprep.subr.bf16.mxu0 0
    %1076 = vmatpush1.bf16.msra.mxu0 0
    %1077 = vmatprep.subr.bf16.mxu0 0
    %1078 = vmatpush1.bf16.msra.mxu0 0
    %1079 = vmatprep.subr.bf16.mxu0 0
    %1080 = vmatpush1.bf16.msra.mxu0 0
    %1081 = vmatprep.subr.bf16.mxu0 0
    %1082 = vmatpush1.bf16.msra.mxu0 0
    %1083 = vmatprep.mubr.bf16.mxu0 0
    %1084 = vmatmul.mubr.bf16.gmra.mrb[0].mxu0 %v1049
    %v1085 = vpop.f32.mrb[0].mxu0
    %v1086 = vadd.f32 0.0, %v1085
    %v1087 = vpop.f32.mrb[0].mxu0
    %v1088 = vadd.f32 0.0, %v1087
    %v1089 = vpop.f32.mrb[0].mxu0
    %v1090 = vadd.f32 0.0, %v1089
    %v1091 = vpop.f32.mrb[0].mxu0
    %v1092 = vadd.f32 0.0, %v1091
    %1093 = vdwg.mxu0
    %v1094 = vpack.c.bf16 %v1092, %v1088
    %s1095 = scalar_lea.vmem [#allocation5], 8
    %v1096 = vld [vmem:[%s1095] sm:$0xf]
    %v1097 = vld [vmem:[%s1095 + $0x4] sm:$0xf]
    %1099 = vrot.lane.b32.xlu0 %v1094, 96
    %v1100 = vpop.permute.xlu0 %1099
    %v1103 = vunpack.c.l.b16 %v1096
    %v1104 = vunpack.c.l.b16 %v1097
    %v1105 = vpack.c.b16 %v1104, %v1103
    %v1108 = vsel %vm235, %v1100, 0
    %1110 = vmatprep.subr.bf16.mxu0 0
    %1111 = vmatpush1.bf16.msra.mxu0 %v1105
    %1112 = vmatprep.subr.bf16.mxu0 0
    %1113 = vmatpush1.bf16.msra.mxu0 0
    %1114 = vmatprep.subr.bf16.mxu0 0
    %1115 = vmatpush1.bf16.msra.mxu0 0
    %1116 = vmatprep.subr.bf16.mxu0 0
    %1117 = vmatpush1.bf16.msra.mxu0 0
    %1118 = vmatprep.subr.bf16.mxu0 0
    %1119 = vmatpush1.bf16.msra.mxu0 0
    %1120 = vmatprep.subr.bf16.mxu0 0
    %1121 = vmatpush1.bf16.msra.mxu0 0
    %1122 = vmatprep.subr.bf16.mxu0 0
    %1123 = vmatpush1.bf16.msra.mxu0 0
    %1124 = vmatprep.subr.bf16.mxu0 0
    %1125 = vmatpush1.bf16.msra.mxu0 0
    %1126 = vmatprep.subr.bf16.mxu0 0
    %1127 = vmatpush1.bf16.msra.mxu0 0
    %1128 = vmatprep.subr.bf16.mxu0 0
    %1129 = vmatpush1.bf16.msra.mxu0 0
    %1130 = vmatprep.subr.bf16.mxu0 0
    %1131 = vmatpush1.bf16.msra.mxu0 0
    %1132 = vmatprep.subr.bf16.mxu0 0
    %1133 = vmatpush1.bf16.msra.mxu0 0
    %1134 = vmatprep.subr.bf16.mxu0 0
    %1135 = vmatpush1.bf16.msra.mxu0 0
    %1136 = vmatprep.subr.bf16.mxu0 0
    %1137 = vmatpush1.bf16.msra.mxu0 0
    %1138 = vmatprep.subr.bf16.mxu0 0
    %1139 = vmatpush1.bf16.msra.mxu0 0
    %1140 = vmatprep.subr.bf16.mxu0 0
    %1141 = vmatpush1.bf16.msra.mxu0 0
    %1142 = vmatprep.mubr.bf16.mxu0 0
    %1143 = vmatmul.mubr.bf16.gmra.mrb[0].mxu0 %v1108
    %v1144 = vpop.f32.mrb[0].mxu0
    %v1145 = vadd.f32 0.0, %v1144
    %v1146 = vpop.f32.mrb[0].mxu0
    %v1147 = vpop.f32.mrb[0].mxu0
    %v1148 = vadd.f32 0.0, %v1147
    %v1149 = vpop.f32.mrb[0].mxu0
    %1150 = vdwg.mxu0
    %v1151 = vadd.f32 %v1086, %v1145
    %v1152 = vadd.f32 %v1090, %v1148
    %v1153 = vmul.f32 %v1151, %v238
    %v1154 = vmul.f32 %v1152, %v238
    %v1155 = vmul.f32 %v1151, %v428
    %v1156 = vmul.f32 %v1152, %v428
    %1159 = vrot.lane.b32.xlu0 %v1155, 64
    %v1160 = vpop.permute.xlu0 %1159
    %1161 = vrot.lane.b32.xlu0 %v1156, 64
    %v1162 = vpop.permute.xlu0 %1161
    %v1165 = vadd.f32 %v1153, %v1160
    %v1166 = vadd.f32 %v1154, %v1162
    %v1167 = vmul.f32 %v1086, %v444
    %v1168 = vmul.f32 %v1090, %v444
    %v1169 = vmul.f32 %v1088, %v251
    %v1170 = vmul.f32 %v1092, %v251
    %1173 = vrot.lane.b32.xlu0 %v1169, 96
    %v1174 = vpop.permute.xlu0 %1173
    %1175 = vrot.lane.b32.xlu0 %v1170, 96
    %v1176 = vpop.permute.xlu0 %1175
    %v1179 = vadd.f32 %v1167, %v1174
    %v1180 = vadd.f32 %v1168, %v1176
    %v1181 = vmul.f32 %v1165, %v252
    %v1182 = vmul.f32 %v1166, %v253
    %v1183 = vmul.f32 %v1165, %v254
    %v1184 = vmul.f32 %v1166, %v255
    %v1185 = vmul.f32 %v1165, %v256
    %v1186 = vmul.f32 %v1166, %v257
    %v1187 = vmul.f32 %v1165, %v258
    %v1188 = vmul.f32 %v1166, %v259
    %v1189 = vpack.c.bf16 %v1182, %v1181
    %v1190 = vpack.c.bf16 %v1184, %v1183
    %v1191 = vpack.c.bf16 %v1186, %v1185
    %v1192 = vpack.c.bf16 %v1188, %v1187
    %v1193 = vpack.c.bf16 %v1180, %v1179
    %1195 = vrot.lane.b32.xlu0 %v1193, 32
    %v1196 = vpop.permute.xlu0 %1195
    %v1198 = vsel %vm271, %v1189, 0
    %v1201 = vsel %vm271, %v1190, 0
    %v1204 = vsel %vm271, %v1191, 0
    %v1207 = vsel %vm271, %v1192, 0
    %v1210 = vsel %vm271, %v1196, 0
    %1212 = vmatprep.subr.bf16.mxu0 0
    %1213 = vmatpush1.bf16.xpose.msra.mxu0 %v1210
    %1214 = vmatprep.subr.bf16.mxu0 0
    %1215 = vmatpush1.bf16.xpose.msra.mxu0 0
    %1216 = vmatprep.subr.bf16.mxu0 0
    %1217 = vmatpush1.bf16.xpose.msra.mxu0 0
    %1218 = vmatprep.subr.bf16.mxu0 0
    %1219 = vmatpush1.bf16.xpose.msra.mxu0 0
    %1220 = vmatprep.subr.bf16.mxu0 0
    %1221 = vmatpush1.bf16.xpose.msra.mxu0 0
    %1222 = vmatprep.subr.bf16.mxu0 0
    %1223 = vmatpush1.bf16.xpose.msra.mxu0 0
    %1224 = vmatprep.subr.bf16.mxu0 0
    %1225 = vmatpush1.bf16.xpose.msra.mxu0 0
    %1226 = vmatprep.subr.bf16.mxu0 0
    %1227 = vmatpush1.bf16.xpose.msra.mxu0 0
    %1228 = vmatprep.subr.bf16.mxu0 0
    %1229 = vmatpush1.bf16.xpose.msra.mxu0 0
    %1230 = vmatprep.subr.bf16.mxu0 0
    %1231 = vmatpush1.bf16.xpose.msra.mxu0 0
    %1232 = vmatprep.subr.bf16.mxu0 0
    %1233 = vmatpush1.bf16.xpose.msra.mxu0 0
    %1234 = vmatprep.subr.bf16.mxu0 0
    %1235 = vmatpush1.bf16.xpose.msra.mxu0 0
    %1236 = vmatprep.subr.bf16.mxu0 0
    %1237 = vmatpush1.bf16.xpose.msra.mxu0 0
    %1238 = vmatprep.subr.bf16.mxu0 0
    %1239 = vmatpush1.bf16.xpose.msra.mxu0 0
    %1240 = vmatprep.subr.bf16.mxu0 0
    %1241 = vmatpush1.bf16.xpose.msra.mxu0 0
    %1242 = vmatprep.subr.bf16.mxu0 0
    %1243 = vmatpush1.bf16.xpose.msra.mxu0 0
    %1244 = vmatprep.mubr.bf16.mxu0 0
    %1245 = vmatmul.mubr.bf16.gmra.mrb[0].mxu0 %v1198
    %v1246 = vpop.f32.mrb[0].mxu0
    %v1247 = vadd.f32 %v260, %v1246
    %v1248 = vpop.f32.mrb[0].mxu0
    %v1249 = vpop.f32.mrb[0].mxu0
    %v1250 = vadd.f32 %v261, %v1249
    %v1251 = vpop.f32.mrb[0].mxu0
    %1252 = vmatprep.mubr.bf16.mxu0 0
    %1253 = vmatmul.mubr.bf16.gmra.mrb[0].mxu0 %v1201
    %v1254 = vpop.f32.mrb[0].mxu0
    %v1255 = vadd.f32 %v262, %v1254
    %v1256 = vpop.f32.mrb[0].mxu0
    %v1257 = vpop.f32.mrb[0].mxu0
    %v1258 = vadd.f32 %v263, %v1257
    %v1259 = vpop.f32.mrb[0].mxu0
    %1260 = vmatprep.mubr.bf16.mxu0 0
    %1261 = vmatmul.mubr.bf16.gmra.mrb[0].mxu0 %v1204
    %v1262 = vpop.f32.mrb[0].mxu0
    %v1263 = vadd.f32 %v264, %v1262
    %v1264 = vpop.f32.mrb[0].mxu0
    %v1265 = vpop.f32.mrb[0].mxu0
    %v1266 = vadd.f32 %v265, %v1265
    %v1267 = vpop.f32.mrb[0].mxu0
    %1268 = vmatprep.mubr.bf16.mxu0 0
    %1269 = vmatmul.mubr.bf16.gmra.mrb[0].mxu0 %v1207
    %v1270 = vpop.f32.mrb[0].mxu0
    %v1271 = vadd.f32 %v266, %v1270
    %v1272 = vpop.f32.mrb[0].mxu0
    %v1273 = vpop.f32.mrb[0].mxu0
    %v1274 = vadd.f32 %v267, %v1273
    %v1275 = vpop.f32.mrb[0].mxu0
    %1276 = vdwg.mxu0
    %v1277 = vsel %vm235, %v1247, -inf
    %1278 = vmax.xlane.f32.xlu0 %v1277
    %v1279 = vpop.xlane.xlu0 %1278
    %v1280 = vsel %vm235, %v1250, -inf
    %1281 = vmax.xlane.f32.xlu0 %v1280
    %v1282 = vpop.xlane.xlu0 %1281
    %v1283 = vsel %vm235, %v1255, -inf
    %1284 = vmax.xlane.f32.xlu0 %v1283
    %v1285 = vpop.xlane.xlu0 %1284
    %v1286 = vsel %vm235, %v1258, -inf
    %1287 = vmax.xlane.f32.xlu0 %v1286
    %v1288 = vpop.xlane.xlu0 %1287
    %v1289 = vsel %vm235, %v1263, -inf
    %1290 = vmax.xlane.f32.xlu0 %v1289
    %v1291 = vpop.xlane.xlu0 %1290
    %v1292 = vsel %vm235, %v1266, -inf
    %1293 = vmax.xlane.f32.xlu0 %v1292
    %v1294 = vpop.xlane.xlu0 %1293
    %v1295 = vsel %vm235, %v1271, -inf
    %1296 = vmax.xlane.f32.xlu0 %v1295
    %v1297 = vpop.xlane.xlu0 %1296
    %v1298 = vsel %vm235, %v1274, -inf
    %1299 = vmax.xlane.f32.xlu0 %v1298
    %v1300 = vpop.xlane.xlu0 %1299
    %v1301 = vsub.f32 %v1247, %v1279
    %v1302 = vsub.f32 %v1250, %v1282
    %v1303 = vsub.f32 %v1255, %v1285
    %v1304 = vsub.f32 %v1258, %v1288
    %v1305 = vsub.f32 %v1263, %v1291
    %v1306 = vsub.f32 %v1266, %v1294
    %v1307 = vsub.f32 %v1271, %v1297
    %v1308 = vsub.f32 %v1274, %v1300
    %v1309 = vmul.f32 %v1301, 1.442695
    %v1310 = vpow.pop %v1309
    %v1311 = vmul.f32 %v1302, 1.442695
    %v1312 = vpow.pop %v1311
    %v1313 = vmul.f32 %v1303, 1.442695
    %v1314 = vpow.pop %v1313
    %v1315 = vmul.f32 %v1304, 1.442695
    %v1316 = vpow.pop %v1315
    %v1317 = vmul.f32 %v1305, 1.442695
    %v1318 = vpow.pop %v1317
    %v1319 = vmul.f32 %v1306, 1.442695
    %v1320 = vpow.pop %v1319
    %v1321 = vmul.f32 %v1307, 1.442695
    %v1322 = vpow.pop %v1321
    %v1323 = vmul.f32 %v1308, 1.442695
    %v1324 = vpow.pop %v1323
    %v1325 = vsel %vm235, %v1310, 0.0
    %1326 = vadd.xlane.f32.xlu0 %v1325
    %v1327 = vpop.xlane.xlu0 %1326
    %v1328 = vsel %vm235, %v1312, 0.0
    %1329 = vadd.xlane.f32.xlu0 %v1328
    %v1330 = vpop.xlane.xlu0 %1329
    %v1331 = vsel %vm235, %v1314, 0.0
    %1332 = vadd.xlane.f32.xlu0 %v1331
    %v1333 = vpop.xlane.xlu0 %1332
    %v1334 = vsel %vm235, %v1316, 0.0
    %1335 = vadd.xlane.f32.xlu0 %v1334
    %v1336 = vpop.xlane.xlu0 %1335
    %v1337 = vsel %vm235, %v1318, 0.0
    %1338 = vadd.xlane.f32.xlu0 %v1337
    %v1339 = vpop.xlane.xlu0 %1338
    %v1340 = vsel %vm235, %v1320, 0.0
    %1341 = vadd.xlane.f32.xlu0 %v1340
    %v1342 = vpop.xlane.xlu0 %1341
    %v1343 = vsel %vm235, %v1322, 0.0
    %1344 = vadd.xlane.f32.xlu0 %v1343
    %v1345 = vpop.xlane.xlu0 %1344
    %v1346 = vsel %vm235, %v1324, 0.0
    %1347 = vadd.xlane.f32.xlu0 %v1346
    %v1348 = vpop.xlane.xlu0 %1347
    %v1349 = vrcp.pop %v1327
    %v1350 = vmul.f32 %v1310, %v1349
    %v1351 = vrcp.pop %v1330
    %v1352 = vmul.f32 %v1312, %v1351
    %v1353 = vrcp.pop %v1333
    %v1354 = vmul.f32 %v1314, %v1353
    %v1355 = vrcp.pop %v1336
    %v1356 = vmul.f32 %v1316, %v1355
    %v1357 = vrcp.pop %v1339
    %v1358 = vmul.f32 %v1318, %v1357
    %v1359 = vrcp.pop %v1342
    %v1360 = vmul.f32 %v1320, %v1359
    %v1361 = vrcp.pop %v1345
    %v1362 = vmul.f32 %v1322, %v1361
    %v1363 = vrcp.pop %v1348
    %v1364 = vmul.f32 %v1324, %v1363
    %v1365 = vpack.c.bf16 %v1352, %v1350
    %v1366 = vpack.c.bf16 %v1356, %v1354
    %v1367 = vpack.c.bf16 %v1360, %v1358
    %v1368 = vpack.c.bf16 %v1364, %v1362
    %v1369 = vpack.c.bf16 %v1152, %v1151
    %1371 = vrot.lane.b32.xlu0 %v1369, 96
    %v1372 = vpop.permute.xlu0 %1371
    %v1375 = vsel %vm235, %v1365, 0
    %v1378 = vsel %vm235, %v1366, 0
    %v1381 = vsel %vm235, %v1367, 0
    %v1384 = vsel %vm235, %v1368, 0
    %1386 = vmatprep.subr.bf16.mxu0 0
    %1387 = vmatpush1.bf16.msra.mxu0 %v1372
    %1388 = vmatprep.subr.bf16.mxu0 0
    %1389 = vmatpush1.bf16.msra.mxu0 0
    %1390 = vmatprep.subr.bf16.mxu0 0
    %1391 = vmatpush1.bf16.msra.mxu0 0
    %1392 = vmatprep.subr.bf16.mxu0 0
    %1393 = vmatpush1.bf16.msra.mxu0 0
    %1394 = vmatprep.subr.bf16.mxu0 0
    %1395 = vmatpush1.bf16.msra.mxu0 0
    %1396 = vmatprep.subr.bf16.mxu0 0
    %1397 = vmatpush1.bf16.msra.mxu0 0
    %1398 = vmatprep.subr.bf16.mxu0 0
    %1399 = vmatpush1.bf16.msra.mxu0 0
    %1400 = vmatprep.subr.bf16.mxu0 0
    %1401 = vmatpush1.bf16.msra.mxu0 0
    %1402 = vmatprep.subr.bf16.mxu0 0
    %1403 = vmatpush1.bf16.msra.mxu0 0
    %1404 = vmatprep.subr.bf16.mxu0 0
    %1405 = vmatpush1.bf16.msra.mxu0 0
    %1406 = vmatprep.subr.bf16.mxu0 0
    %1407 = vmatpush1.bf16.msra.mxu0 0
    %1408 = vmatprep.subr.bf16.mxu0 0
    %1409 = vmatpush1.bf16.msra.mxu0 0
    %1410 = vmatprep.subr.bf16.mxu0 0
    %1411 = vmatpush1.bf16.msra.mxu0 0
    %1412 = vmatprep.subr.bf16.mxu0 0
    %1413 = vmatpush1.bf16.msra.mxu0 0
    %1414 = vmatprep.subr.bf16.mxu0 0
    %1415 = vmatpush1.bf16.msra.mxu0 0
    %1416 = vmatprep.subr.bf16.mxu0 0
    %1417 = vmatpush1.bf16.msra.mxu0 0
    %1418 = vmatprep.mubr.bf16.mxu0 0
    %1419 = vmatmul.mubr.bf16.gmra.mrb[0].mxu0 %v1375
    %v1420 = vpop.f32.mrb[0].mxu0
    %v1421 = vadd.f32 0.0, %v1420
    %v1422 = vpop.f32.mrb[0].mxu0
    %v1423 = vpop.f32.mrb[0].mxu0
    %v1424 = vadd.f32 0.0, %v1423
    %v1425 = vpop.f32.mrb[0].mxu0
    %1426 = vmatprep.mubr.bf16.mxu0 0
    %1427 = vmatmul.mubr.bf16.gmra.mrb[0].mxu0 %v1378
    %v1428 = vpop.f32.mrb[0].mxu0
    %v1429 = vadd.f32 0.0, %v1428
    %v1430 = vpop.f32.mrb[0].mxu0
    %v1431 = vpop.f32.mrb[0].mxu0
    %v1432 = vadd.f32 0.0, %v1431
    %v1433 = vpop.f32.mrb[0].mxu0
    %1434 = vmatprep.mubr.bf16.mxu0 0
    %1435 = vmatmul.mubr.bf16.gmra.mrb[0].mxu0 %v1381
    %v1436 = vpop.f32.mrb[0].mxu0
    %v1437 = vadd.f32 0.0, %v1436
    %v1438 = vpop.f32.mrb[0].mxu0
    %v1439 = vpop.f32.mrb[0].mxu0
    %v1440 = vadd.f32 0.0, %v1439
    %v1441 = vpop.f32.mrb[0].mxu0
    %1442 = vmatprep.mubr.bf16.mxu0 0
    %1443 = vmatmul.mubr.bf16.gmra.mrb[0].mxu0 %v1384
    %v1444 = vpop.f32.mrb[0].mxu0
    %v1445 = vadd.f32 0.0, %v1444
    %v1446 = vpop.f32.mrb[0].mxu0
    %v1447 = vpop.f32.mrb[0].mxu0
    %v1448 = vadd.f32 0.0, %v1447
    %v1449 = vpop.f32.mrb[0].mxu0
    %1450 = vdwg.mxu0
    %v1451 = vmul.f32 %v1421, %v252
    %v1452 = vmul.f32 %v1424, %v253
    %v1453 = vmul.f32 %v1429, %v254
    %v1454 = vmul.f32 %v1432, %v255
    %v1455 = vmul.f32 %v1437, %v256
    %v1456 = vmul.f32 %v1440, %v257
    %v1457 = vmul.f32 %v1445, %v258
    %v1458 = vmul.f32 %v1448, %v259
    %v1459 = vadd.f32 %v1451, %v1453
    %v1460 = vadd.f32 %v1452, %v1454
    %v1461 = vadd.f32 %v1459, %v1455
    %v1462 = vadd.f32 %v1460, %v1456
    %v1463 = vadd.f32 %v1461, %v1457
    %v1464 = vadd.f32 %v1462, %v1458
    %v1465 = vpack.c.bf16 %v1464, %v1463
    %s1466 = scalar_lea.vmem %s9, 16
    %v1467 = vld [vmem:[%s1466] sm:$0xf]
    %v1468 = vld [vmem:[%s1466 + $0x4] sm:$0xf]
    %v1469 = vld [vmem:[%s1466 + $0x8] sm:$0xf]
    %v1470 = vld [vmem:[%s1466 + $0xc] sm:$0xf]
    %v1475 = vunpack.c.l.b16 %v1467
    %v1476 = vunpack.c.l.b16 %v1468
    %v1477 = vunpack.c.l.b16 %v1469
    %v1478 = vunpack.c.l.b16 %v1470
    %v1479 = vpack.c.b16 %v1476, %v1475
    %v1480 = vpack.c.b16 %v1478, %v1477
    %v1484 = vsel %vm271, %v1465, 0
    %1486 = vmatprep.subr.bf16.mxu0 0
    %1487 = vmatpush1.bf16.msra.mxu0 %v1479
    %1488 = vmatprep.subr.bf16.mxu0 0
    %1489 = vmatpush1.bf16.msra.mxu0 %v1480
    %1490 = vmatprep.subr.bf16.mxu0 0
    %1491 = vmatpush1.bf16.msra.mxu0 0
    %1492 = vmatprep.subr.bf16.mxu0 0
    %1493 = vmatpush1.bf16.msra.mxu0 0
    %1494 = vmatprep.subr.bf16.mxu0 0
    %1495 = vmatpush1.bf16.msra.mxu0 0
    %1496 = vmatprep.subr.bf16.mxu0 0
    %1497 = vmatpush1.bf16.msra.mxu0 0
    %1498 = vmatprep.subr.bf16.mxu0 0
    %1499 = vmatpush1.bf16.msra.mxu0 0
    %1500 = vmatprep.subr.bf16.mxu0 0
    %1501 = vmatpush1.bf16.msra.mxu0 0
    %1502 = vmatprep.subr.bf16.mxu0 0
    %1503 = vmatpush1.bf16.msra.mxu0 0
    %1504 = vmatprep.subr.bf16.mxu0 0
    %1505 = vmatpush1.bf16.msra.mxu0 0
    %1506 = vmatprep.subr.bf16.mxu0 0
    %1507 = vmatpush1.bf16.msra.mxu0 0
    %1508 = vmatprep.subr.bf16.mxu0 0
    %1509 = vmatpush1.bf16.msra.mxu0 0
    %1510 = vmatprep.subr.bf16.mxu0 0
    %1511 = vmatpush1.bf16.msra.mxu0 0
    %1512 = vmatprep.subr.bf16.mxu0 0
    %1513 = vmatpush1.bf16.msra.mxu0 0
    %1514 = vmatprep.subr.bf16.mxu0 0
    %1515 = vmatpush1.bf16.msra.mxu0 0
    %1516 = vmatprep.subr.bf16.mxu0 0
    %1517 = vmatpush1.bf16.msra.mxu0 0
    %1518 = vmatprep.mubr.bf16.mxu0 0
    %1519 = vmatmul.mubr.bf16.gmra.mrb[0].mxu0 %v1484
    %v1520 = vpop.f32.mrb[0].mxu0
    %v1521 = vadd.f32 0.0, %v1520
    %v1522 = vpop.f32.mrb[0].mxu0
    %v1523 = vpop.f32.mrb[0].mxu0
    %v1524 = vadd.f32 0.0, %v1523
    %v1525 = vpop.f32.mrb[0].mxu0
    %1526 = vdwg.mxu0
    %v1527 = vadd.f32 %v994, %v1521
    %v1528 = vadd.f32 %v995, %v1524
    %s1529 = scalar_lea.vmem [#allocation7], 1
    %v1530 = vld [vmem:[%s1529] sm:$0x1]
    %v1531 = vmul.f32 %v1527, %v1527
    %v1532 = vmul.f32 %v1528, %v1528
    %v1533 = vsel %vm271, %v1531, 0.0
    %1534 = vadd.xlane.f32.xlu0 %v1533
    %v1535 = vpop.xlane.xlu0 %1534
    %v1536 = vsel %vm271, %v1532, 0.0
    %1537 = vadd.xlane.f32.xlu0 %v1536
    %v1538 = vpop.xlane.xlu0 %1537
    %v1539 = vmul.f32 %v1535, %v278
    %v1540 = vmul.f32 %v1538, %v278
    %v1541 = vadd.f32 %v1539, 1e-06
    %v1542 = vadd.f32 %v1540, 1e-06
    %v1543 = vrsqrt.pop %v1541
    %v1544 = vrsqrt.pop %v1542
    %v1545 = vmul.f32 %v1527, %v1543
    %v1546 = vmul.f32 %v1528, %v1544
    %v1548 = vlaneseq
    %v1549 = vshrl.u32 %v1548, 7
    %v1550 = vsub.s32 0, %v1549
    %v1551 = vrot.slane %v1530, %v1550
    %v1553 = vmul.f32 %v1545, %v1551
    %v1554 = vmul.f32 %v1546, %v1551
    %v1555 = vpack.c.bf16 %v1554, %v1553
    %s1556 = scalar_lea.vmem [#allocation8], 16
    %v1557 = vld [vmem:[%s1556] sm:$0xf]
    %v1558 = vld [vmem:[%s1556 + $0x4] sm:$0xf]
    %v1559 = vld [vmem:[%s1556 + $0x8] sm:$0xf]
    %v1560 = vld [vmem:[%s1556 + $0xc] sm:$0xf]
    %v1565 = vunpack.c.l.b16 %v1557
    %v1566 = vunpack.c.l.b16 %v1558
    %v1567 = vunpack.c.l.b16 %v1559
    %v1568 = vunpack.c.l.b16 %v1560
    %v1569 = vpack.c.b16 %v1566, %v1565
    %v1570 = vpack.c.b16 %v1568, %v1567
    %v1574 = vsel %vm271, %v1555, 0
    %1576 = vmatprep.subr.bf16.mxu0 0
    %1577 = vmatpush1.bf16.msra.mxu0 %v1569
    %1578 = vmatprep.subr.bf16.mxu0 0
    %1579 = vmatpush1.bf16.msra.mxu0 %v1570
    %1580 = vmatprep.subr.bf16.mxu0 0
    %1581 = vmatpush1.bf16.msra.mxu0 0
    %1582 = vmatprep.subr.bf16.mxu0 0
    %1583 = vmatpush1.bf16.msra.mxu0 0
    %1584 = vmatprep.subr.bf16.mxu0 0
    %1585 = vmatpush1.bf16.msra.mxu0 0
    %1586 = vmatprep.subr.bf16.mxu0 0
    %1587 = vmatpush1.bf16.msra.mxu0 0
    %1588 = vmatprep.subr.bf16.mxu0 0
    %1589 = vmatpush1.bf16.msra.mxu0 0
    %1590 = vmatprep.subr.bf16.mxu0 0
    %1591 = vmatpush1.bf16.msra.mxu0 0
    %1592 = vmatprep.subr.bf16.mxu0 0
    %1593 = vmatpush1.bf16.msra.mxu0 0
    %1594 = vmatprep.subr.bf16.mxu0 0
    %1595 = vmatpush1.bf16.msra.mxu0 0
    %1596 = vmatprep.subr.bf16.mxu0 0
    %1597 = vmatpush1.bf16.msra.mxu0 0
    %1598 = vmatprep.subr.bf16.mxu0 0
    %1599 = vmatpush1.bf16.msra.mxu0 0
    %1600 = vmatprep.subr.bf16.mxu0 0
    %1601 = vmatpush1.bf16.msra.mxu0 0
    %1602 = vmatprep.subr.bf16.mxu0 0
    %1603 = vmatpush1.bf16.msra.mxu0 0
    %1604 = vmatprep.subr.bf16.mxu0 0
    %1605 = vmatpush1.bf16.msra.mxu0 0
    %1606 = vmatprep.subr.bf16.mxu0 0
    %1607 = vmatpush1.bf16.msra.mxu0 0
    %1608 = vmatprep.mubr.bf16.mxu0 0
    %1609 = vmatmul.mubr.bf16.gmra.mrb[0].mxu0 %v1574
    %v1610 = vpop.f32.mrb[0].mxu0
    %v1611 = vadd.f32 0.0, %v1610
    %v1612 = vpop.f32.mrb[0].mxu0
    %v1613 = vpop.f32.mrb[0].mxu0
    %v1614 = vadd.f32 0.0, %v1613
    %v1615 = vpop.f32.mrb[0].mxu0
    %1616 = vdwg.mxu0
    %v1617 = vsub.f32 0.0, %v1611
    %v1618 = vsub.f32 0.0, %v1614
    %v1619 = vmul.f32 %v1617, 1.442695
    %v1620 = vpow.pop %v1619
    %v1621 = vmul.f32 %v1618, 1.442695
    %v1622 = vpow.pop %v1621
    %v1623 = vadd.f32 %v1620, 1.0
    %v1624 = vadd.f32 %v1622, 1.0
    %v1625 = vrcp.pop %v1623
    %v1626 = vmul.f32 1.0, %v1625
    %v1627 = vrcp.pop %v1624
    %v1628 = vmul.f32 1.0, %v1627
    %v1629 = vmul.f32 %v1611, %v1626
    %v1630 = vmul.f32 %v1614, %v1628
    %1633 = vrot.lane.b32.xlu0 %v1611, 64
    %v1634 = vpop.permute.xlu0 %1633
    %1635 = vrot.lane.b32.xlu0 %v1614, 64
    %v1636 = vpop.permute.xlu0 %1635
    %v1639 = vmul.f32 %v1629, %v1634
    %v1640 = vmul.f32 %v1630, %v1636
    %v1641 = vpack.c.bf16 %v1640, %v1639
    %s1642 = scalar_lea.vmem %s12, 32
    %v1643 = vld [vmem:[%s1642] sm:$0xf]
    %v1644 = vld [vmem:[%s1642 + $0x4] sm:$0xf]
    %v1645 = vld [vmem:[%s1642 + $0x8] sm:$0xf]
    %v1646 = vld [vmem:[%s1642 + $0xc] sm:$0xf]
    %v1647 = vld [vmem:[%s1642 + $0x10] sm:$0xf]
    %v1648 = vld [vmem:[%s1642 + $0x14] sm:$0xf]
    %v1649 = vld [vmem:[%s1642 + $0x18] sm:$0xf]
    %v1650 = vld [vmem:[%s1642 + $0x1c] sm:$0xf]
    %v1659 = vunpack.c.l.b16 %v1643
    %v1660 = vunpack.c.l.b16 %v1644
    %v1661 = vunpack.c.l.b16 %v1645
    %v1662 = vunpack.c.l.b16 %v1646
    %v1663 = vunpack.c.l.b16 %v1647
    %v1664 = vunpack.c.l.b16 %v1648
    %v1665 = vunpack.c.l.b16 %v1649
    %v1666 = vunpack.c.l.b16 %v1650
    %v1667 = vpack.c.b16 %v1660, %v1659
    %v1668 = vpack.c.b16 %v1662, %v1661
    %v1669 = vpack.c.b16 %v1664, %v1663
    %v1670 = vpack.c.b16 %v1666, %v1665
    %v1676 = vsel %vm139, %v1641, 0
    %1678 = vmatprep.subr.bf16.mxu0 0
    %1679 = vmatpush1.bf16.msra.mxu0 %v1667
    %1680 = vmatprep.subr.bf16.mxu0 0
    %1681 = vmatpush1.bf16.msra.mxu0 %v1668
    %1682 = vmatprep.subr.bf16.mxu0 0
    %1683 = vmatpush1.bf16.msra.mxu0 %v1669
    %1684 = vmatprep.subr.bf16.mxu0 0
    %1685 = vmatpush1.bf16.msra.mxu0 %v1670
    %1686 = vmatprep.subr.bf16.mxu0 0
    %1687 = vmatpush1.bf16.msra.mxu0 0
    %1688 = vmatprep.subr.bf16.mxu0 0
    %1689 = vmatpush1.bf16.msra.mxu0 0
    %1690 = vmatprep.subr.bf16.mxu0 0
    %1691 = vmatpush1.bf16.msra.mxu0 0
    %1692 = vmatprep.subr.bf16.mxu0 0
    %1693 = vmatpush1.bf16.msra.mxu0 0
    %1694 = vmatprep.subr.bf16.mxu0 0
    %1695 = vmatpush1.bf16.msra.mxu0 0
    %1696 = vmatprep.subr.bf16.mxu0 0
    %1697 = vmatpush1.bf16.msra.mxu0 0
    %1698 = vmatprep.subr.bf16.mxu0 0
    %1699 = vmatpush1.bf16.msra.mxu0 0
    %1700 = vmatprep.subr.bf16.mxu0 0
    %1701 = vmatpush1.bf16.msra.mxu0 0
    %1702 = vmatprep.subr.bf16.mxu0 0
    %1703 = vmatpush1.bf16.msra.mxu0 0
    %1704 = vmatprep.subr.bf16.mxu0 0
    %1705 = vmatpush1.bf16.msra.mxu0 0
    %1706 = vmatprep.subr.bf16.mxu0 0
    %1707 = vmatpush1.bf16.msra.mxu0 0
    %1708 = vmatprep.subr.bf16.mxu0 0
    %1709 = vmatpush1.bf16.msra.mxu0 0
    %1710 = vmatprep.mubr.bf16.mxu0 0
    %1711 = vmatmul.mubr.bf16.gmra.mrb[0].mxu0 %v1676
    %v1712 = vpop.f32.mrb[0].mxu0
    %v1713 = vadd.f32 0.0, %v1712
    %v1714 = vpop.f32.mrb[0].mxu0
    %v1715 = vpop.f32.mrb[0].mxu0
    %v1716 = vadd.f32 0.0, %v1715
    %v1717 = vpop.f32.mrb[0].mxu0
    %1718 = vdwg.mxu0
    %v1719 = vadd.f32 %v1527, %v1713
    %v1720 = vadd.f32 %v1528, %v1716
    %v1721 = vld [vmem:[#allocation10] sm:$0x1]
    %v1722 = vmul.f32 %v1719, %v1719
    %v1723 = vmul.f32 %v1720, %v1720
    %v1724 = vsel %vm271, %v1722, 0.0
    %1725 = vadd.xlane.f32.xlu0 %v1724
    %v1726 = vpop.xlane.xlu0 %1725
    %v1727 = vsel %vm271, %v1723, 0.0
    %1728 = vadd.xlane.f32.xlu0 %v1727
    %v1729 = vpop.xlane.xlu0 %1728
    %v1730 = vmul.f32 %v1726, %v278
    %v1731 = vmul.f32 %v1729, %v278
    %v1732 = vadd.f32 %v1730, 1e-06
    %v1733 = vadd.f32 %v1731, 1e-06
    %v1734 = vrsqrt.pop %v1732
    %v1735 = vrsqrt.pop %v1733
    %v1736 = vmul.f32 %v1719, %v1734
    %v1737 = vmul.f32 %v1720, %v1735
    %v1739 = vlaneseq
    %v1740 = vshrl.u32 %v1739, 7
    %v1741 = vsub.s32 0, %v1740
    %v1742 = vrot.slane %v1721, %v1741
    %v1744 = vmul.f32 %v1736, %v1742
    %v1745 = vmul.f32 %v1737, %v1742
    %1746 = vst.msk [vmem:[#allocation11] sm:$0xff] %vm271, %v1744
    %1747 = vst.msk [vmem:[#allocation11 + $0x8] sm:$0xff] %vm271, %v1745
    // Predicated region
    $region78: #{longlora_forward.1} parent=1 // pred_check
      _
    $region79: #{longlora_forward.1} parent=1 // pred_check_branch
      %1749 = sbr.rel (0) target = $region81
    $region80: #{longlora_forward.1} parent=1 // pred_region
      %s1751 = ssub.s32 256, 256
      %1752 = vsyncadd [#allocation4], %s1751
      %s1753 = sshll.u32 [#allocation11], 4
      %s1754 = int_to_ptr.vmem [resolvable:$true] %s1753
      %1759 = dma.vmem_to_hbm [thread:$0]  %s1754, 256, %s14, [#allocation4], 128, 128, 8
    $region81: #{longlora_forward.1} parent=1 // pred_fallthru
      _
    // Predicated region
    $region82: #{longlora_forward.1} parent=1 // pred_check
      _
    $region83: #{longlora_forward.1} parent=1 // pred_check_branch
      %1761 = sbr.rel (0) target = $region85
    $region84: #{longlora_forward.1} parent=1 // pred_region
      %1762 = dma.done [#allocation4], 256
    $region85: #{longlora_forward.1} parent=1 // pred_fallthru
      _
    %1763 = vsyncpa [#allocation3], 1
    %1764 = vsyncpa [#allocation6], 1
    %1765 = vsyncpa [#allocation9], 1
    %1766 = vsyncpa [#allocation4], 1

</llo_original>
